<compile_context>
chip_gen: v7x
topology: tpu7x:2x2x1
jax: 0.10.0
libtpu: 0.0.40
codegen_flags: <defaults>
</compile_context>

<pallas_src>
import functools

import jax
import jax.numpy as jnp
from jax.experimental import pallas as pl
from jax.experimental.pallas import tpu as pltpu

EPS = 1e-5  # nn.LayerNorm default
NEG_BIG = -1e30  # finite mask fill (avoids -inf arithmetic; diag always unmasked)


def _layernorm(z, g, b):
    mu = jnp.mean(z, axis=-1, keepdims=True)
    var = jnp.mean((z - mu) ** 2, axis=-1, keepdims=True)
    return (z - mu) * jax.lax.rsqrt(var + EPS) * g + b


def block_kernel(x_ref, ln1g_ref, ln1b_ref, wqkv_ref, wph_ref, bp_ref,
                 ln2g_ref, ln2b_ref, w1_ref, b1_ref, w2_ref, b2_ref,
                 o_ref, xn_ref, sa_ref, mask_ref, *, ffn_chunk):
    h = pl.program_id(1)
    num_h = pl.num_programs(1)

    T = x_ref.shape[1]
    E = x_ref.shape[2]
    hs = wph_ref.shape[1]
    scale = E ** (-0.5)  # PyTorch Head uses C**-0.5 with C = n_embd (intentional)

    # ---- once per batch element (first head): cache LN1(x), zero the
    # ---- attention accumulator, build the causal-mask additive bias. ----
    @pl.when(h == 0)
    def _init():
        xn_ref[...] = _layernorm(x_ref[0], ln1g_ref[0], ln1b_ref[0]).astype(
            jnp.bfloat16)
        sa_ref[...] = jnp.zeros_like(sa_ref)
        row = jax.lax.broadcasted_iota(jnp.int32, (T, T), 0)
        col = jax.lax.broadcasted_iota(jnp.int32, (T, T), 1)
        mask_ref[...] = jnp.where(row >= col, 0.0, NEG_BIG).astype(jnp.float32)

    # ---- attention for the current head (all matmuls bf16 -> f32 acc) ----
    xn_b = xn_ref[...]                                           # (T, E) bf16

    # Fused per-head QKV projection: one (T,E) @ (E, 3*hs) matmul; the
    # per-head weight block is picked by the BlockSpec index_map.
    qkv = jnp.dot(xn_b, wqkv_ref[0], preferred_element_type=jnp.float32)
    q = qkv[:, 0 * hs:1 * hs].astype(jnp.bfloat16)               # (T, hs)
    k = qkv[:, 1 * hs:2 * hs].astype(jnp.bfloat16)
    v = qkv[:, 2 * hs:3 * hs].astype(jnp.bfloat16)

    wei = jnp.einsum('qd,kd->qk', q, k,
                     preferred_element_type=jnp.float32) * scale  # (T, T)
    wei = wei + mask_ref[...]
    wei = wei - jnp.max(wei, axis=-1, keepdims=True)
    p = jnp.exp(wei)
    p = p * pl.reciprocal(jnp.sum(p, axis=-1, keepdims=True), approx=True)

    o_h = jnp.dot(p.astype(jnp.bfloat16), v,
                  preferred_element_type=jnp.float32)            # (T, hs)

    # Accumulate this head's slice of the output projection directly:
    # concat_h(o_h) @ Wp == sum_h o_h @ Wp[h*hs:(h+1)*hs, :]
    sa_ref[...] += jnp.dot(o_h.astype(jnp.bfloat16), wph_ref[0],
                           preferred_element_type=jnp.float32)   # (T, E)

    # ---- after the last head: proj bias, residual, LN2, FFN, residual ----
    @pl.when(h == num_h - 1)
    def _finalize():
        x = x_ref[0]                                             # (T, E) f32
        x1 = x + sa_ref[...] + bp_ref[0]                         # residual 1
        x1n_b = _layernorm(x1, ln2g_ref[0], ln2b_ref[0]).astype(jnp.bfloat16)

        hidden = w1_ref.shape[1]                                 # 4*E
        ff = jnp.zeros((T, E), jnp.float32)
        for c0 in range(0, hidden, ffn_chunk):                   # static unroll
            c1 = c0 + ffn_chunk
            h1 = jnp.maximum(
                jnp.dot(x1n_b, w1_ref[:, c0:c1],
                        preferred_element_type=jnp.float32) + b1_ref[0, c0:c1],
                0.0)
            ff = ff + jnp.dot(h1.astype(jnp.bfloat16), w2_ref[c0:c1, :],
                              preferred_element_type=jnp.float32)
        ff = ff + b2_ref[0]

        o_ref[0] = (x1 + ff).astype(o_ref.dtype)                 # residual 2
    # TODO(synk): dropout omitted (dropout=None / eval mode — identity op).


def block_forward(x, params, *, num_heads):
    B, T, E = x.shape
    H, _, hs = params["wq"].shape
    assert H == num_heads and H * hs == E

    cdt = jnp.bfloat16
    # Fused per-head [q|k|v] weight: (H, E, 3*hs); proj rows per head: (H, hs, E).
    w_qkv = jnp.concatenate(
        [params["wq"], params["wk"], params["wv"]], axis=-1).astype(cdt)
    w_proj = params["wp"].reshape(H, hs, E).astype(cdt)
    w1 = params["w1"].astype(cdt)
    w2 = params["w2"].astype(cdt)

    def vec(p):  # 1-D params -> (1, N) for clean 2-D VMEM layout (kept f32)
        return p.reshape(1, -1)

    hidden = 4 * E
    if hidden <= 512 or hidden % 512 != 0:
        ffn_chunk = hidden
    else:
        ffn_chunk = 512

    const2 = lambda shape: pl.BlockSpec(shape, lambda b, h: (0, 0))

    grid_spec = pltpu.PrefetchScalarGridSpec(
        num_scalar_prefetch=0,
        grid=(B, H),
        in_specs=[
            pl.BlockSpec((1, T, E), lambda b, h: (b, 0, 0)),          # x
            const2((1, E)), const2((1, E)),                           # ln1 g/b
            pl.BlockSpec((1, E, 3 * hs), lambda b, h: (h, 0, 0)),     # W_qkv[h]
            pl.BlockSpec((1, hs, E), lambda b, h: (h, 0, 0)),         # Wp rows[h]
            const2((1, E)),                                           # bp
            const2((1, E)), const2((1, E)),                           # ln2 g/b
            const2((E, 4 * E)), const2((1, 4 * E)),                   # W1, b1
            const2((4 * E, E)), const2((1, E)),                       # W2, b2
        ],
        out_specs=pl.BlockSpec((1, T, E), lambda b, h: (b, 0, 0)),
        scratch_shapes=[
            pltpu.VMEM((T, E), jnp.bfloat16),   # cached LN1(x)
            pltpu.VMEM((T, E), jnp.float32),    # attention/proj accumulator
            pltpu.VMEM((T, T), jnp.float32),    # causal mask additive bias
        ],
    )

    kernel = functools.partial(block_kernel, ffn_chunk=ffn_chunk)
    return pl.pallas_call(
        kernel,
        out_shape=jax.ShapeDtypeStruct((B, T, E), x.dtype),
        grid_spec=grid_spec,
        compiler_params=pltpu.CompilerParams(
            dimension_semantics=("parallel", "arbitrary"),
            vmem_limit_bytes=64 * 1024 * 1024),
    )(x,
      vec(params["ln1_g"]), vec(params["ln1_b"]),
      w_qkv, w_proj, vec(params["bp"]),
      vec(params["ln2_g"]), vec(params["ln2_b"]),
      w1, vec(params["b1"]), w2, vec(params["b2"]))


# ---------------- pure-JAX reference (for correctness check) ----------------
def block_reference(x, params, *, num_heads):
    B, T, E = x.shape

    def layernorm(z, g, b):
        mu = jnp.mean(z, axis=-1, keepdims=True)
        var = jnp.mean((z - mu) ** 2, axis=-1, keepdims=True)
        return (z - mu) / jnp.sqrt(var + EPS) * g + b

    xn = layernorm(x, params["ln1_g"], params["ln1_b"])
    scale = E ** (-0.5)
    mask = jnp.tril(jnp.ones((T, T))) == 0.0
    outs = []
    for h in range(num_heads):
        q = xn @ params["wq"][h]
        k = xn @ params["wk"][h]
        v = xn @ params["wv"][h]
        wei = jnp.einsum("btd,bsd->bts", q, k) * scale
        wei = jnp.where(mask[None], -jnp.inf, wei)
        wei = jax.nn.softmax(wei, axis=-1)
        outs.append(jnp.einsum("bts,bsd->btd", wei, v))
    sa = jnp.concatenate(outs, axis=-1) @ params["wp"] + params["bp"]
    x1 = x + sa
    x1n = layernorm(x1, params["ln2_g"], params["ln2_b"])
    ff = jnp.maximum(x1n @ params["w1"] + params["b1"], 0.0) @ params["w2"] + params["b2"]
    return x1 + ff


def init_params(key, n_embd, n_head, head_size):
    ks = jax.random.split(key, 8)
    s = 0.02
    return {
        "ln1_g": jnp.ones((n_embd,), jnp.float32),
        "ln1_b": jnp.zeros((n_embd,), jnp.float32),
        "wq": s * jax.random.normal(ks[0], (n_head, n_embd, head_size), jnp.float32),
        "wk": s * jax.random.normal(ks[1], (n_head, n_embd, head_size), jnp.float32),
        "wv": s * jax.random.normal(ks[2], (n_head, n_embd, head_size), jnp.float32),
        "wp": s * jax.random.normal(ks[3], (n_embd, n_embd), jnp.float32),
        "bp": s * jax.random.normal(ks[4], (n_embd,), jnp.float32),
        "ln2_g": jnp.ones((n_embd,), jnp.float32),
        "ln2_b": jnp.zeros((n_embd,), jnp.float32),
        "w1": s * jax.random.normal(ks[5], (n_embd, 4 * n_embd), jnp.float32),
        "b1": s * jax.random.normal(ks[6], (4 * n_embd,), jnp.float32),
        "w2": s * jax.random.normal(ks[7], (4 * n_embd, n_embd), jnp.float32),
        "b2": jnp.zeros((n_embd,), jnp.float32),
    }


if __name__ == "__main__":
    B, T, n_embd, n_head = 2, 8, 32, 4
    head_size = n_embd // n_head       # 8; proj assumes n_head*head_size == n_embd

    key = jax.random.PRNGKey(0)
    kx, kp = jax.random.split(key)
    x = jax.random.normal(kx, (B, T, n_embd), jnp.float32)
    params = init_params(kp, n_embd, n_head, head_size)

    out = block_forward(x, params, num_heads=n_head)
    out = jax.block_until_ready(out)

    ref = block_reference(x, params, num_heads=n_head)
    assert out.shape == (B, T, n_embd)
    # Matmuls run in bf16 (f32 accumulation) + approx reciprocal -> loose tol.
    assert jnp.allclose(out, ref, rtol=2e-2, atol=2e-2), "mismatch vs reference"
    print("KERNEL_OK")
</pallas_src>

<mosaic_0001>
module attributes {stable_mosaic.version = 11 : i64} {
  func.func @block_kernel(%arg0: i32, %arg1: i32, %arg2: memref<1x8x32xf32, #tpu.memory_space<vmem>>, %arg3: memref<1x32xf32, #tpu.memory_space<vmem>>, %arg4: memref<1x32xf32, #tpu.memory_space<vmem>>, %arg5: memref<1x32x24xbf16, #tpu.memory_space<vmem>>, %arg6: memref<1x8x32xbf16, #tpu.memory_space<vmem>>, %arg7: memref<1x32xf32, #tpu.memory_space<vmem>>, %arg8: memref<1x32xf32, #tpu.memory_space<vmem>>, %arg9: memref<1x32xf32, #tpu.memory_space<vmem>>, %arg10: memref<32x128xbf16, #tpu.memory_space<vmem>>, %arg11: memref<1x128xf32, #tpu.memory_space<vmem>>, %arg12: memref<128x32xbf16, #tpu.memory_space<vmem>>, %arg13: memref<1x32xf32, #tpu.memory_space<vmem>>, %arg14: memref<1x8x32xf32, #tpu.memory_space<vmem>>, %arg15: memref<8x32xbf16, #tpu.memory_space<vmem>>, %arg16: memref<8x32xf32, #tpu.memory_space<vmem>>, %arg17: memref<8x8xf32, #tpu.memory_space<vmem>>) attributes {dimension_semantics = [#tpu.dimension_semantics<parallel>, #tpu.dimension_semantics<arbitrary>], iteration_bounds = array<i64: 2, 4>, scalar_prefetch = 0 : i64, scratch_operands = 3 : i64, tpu.core_type = #tpu.core_type<tc>, window_params = [{transform_indices = @transform_0, window_bounds = array<i64: 1, 8, 32>}, {pipeline_mode = #tpu.pipeline_mode<synchronous>, transform_indices = @transform_1, window_bounds = array<i64: 1, 32>}, {pipeline_mode = #tpu.pipeline_mode<synchronous>, transform_indices = @transform_2, window_bounds = array<i64: 1, 32>}, {transform_indices = @transform_3, window_bounds = array<i64: 1, 32, 24>}, {transform_indices = @transform_4, window_bounds = array<i64: 1, 8, 32>}, {pipeline_mode = #tpu.pipeline_mode<synchronous>, transform_indices = @transform_5, window_bounds = array<i64: 1, 32>}, {pipeline_mode = #tpu.pipeline_mode<synchronous>, transform_indices = @transform_6, window_bounds = array<i64: 1, 32>}, {pipeline_mode = #tpu.pipeline_mode<synchronous>, transform_indices = @transform_7, window_bounds = array<i64: 1, 32>}, {pipeline_mode = #tpu.pipeline_mode<synchronous>, transform_indices = @transform_8, window_bounds = array<i64: 32, 128>}, {pipeline_mode = #tpu.pipeline_mode<synchronous>, transform_indices = @transform_9, window_bounds = array<i64: 1, 128>}, {pipeline_mode = #tpu.pipeline_mode<synchronous>, transform_indices = @transform_10, window_bounds = array<i64: 128, 32>}, {pipeline_mode = #tpu.pipeline_mode<synchronous>, transform_indices = @transform_11, window_bounds = array<i64: 1, 32>}, {transform_indices = @transform_12, window_bounds = array<i64: 1, 8, 32>}]} {
    %c0_i32 = arith.constant 0 : i32
    %0 = arith.cmpi eq, %arg1, %c0_i32 : i32
    %1 = arith.extui %0 : i1 to i32
    %c0_i32_0 = arith.constant 0 : i32
    %2 = arith.cmpi ne, %1, %c0_i32_0 : i32
    scf.if %2 {
      %c0_21 = arith.constant 0 : index
      %c0_22 = arith.constant 0 : index
      %c0_23 = arith.constant 0 : index
      %40 = vector.load %arg2[%c0_21, %c0_22, %c0_23] : memref<1x8x32xf32, #tpu.memory_space<vmem>>, vector<1x8x32xf32>
      %41 = vector.shape_cast %40 : vector<1x8x32xf32> to vector<8x32xf32>
      %c0_24 = arith.constant 0 : index
      %c0_25 = arith.constant 0 : index
      %42 = vector.load %arg3[%c0_24, %c0_25] : memref<1x32xf32, #tpu.memory_space<vmem>>, vector<1x32xf32>
      %43 = vector.shape_cast %42 : vector<1x32xf32> to vector<32xf32>
      %c0_26 = arith.constant 0 : index
      %c0_27 = arith.constant 0 : index
      %44 = vector.load %arg4[%c0_26, %c0_27] : memref<1x32xf32, #tpu.memory_space<vmem>>, vector<1x32xf32>
      %45 = vector.shape_cast %44 : vector<1x32xf32> to vector<32xf32>
      %cst_28 = arith.constant dense<0.000000e+00> : vector<8xf32>
      %46 = vector.multi_reduction <add>, %41, %cst_28 [1] : vector<8x32xf32> to vector<8xf32>
      %47 = vector.shape_cast %46 : vector<8xf32> to vector<8x1xf32>
      %cst_29 = arith.constant 3.200000e+01 : f32
      %48 = vector.broadcast %cst_29 : f32 to vector<8x1xf32>
      %49 = arith.divf %47, %48 : vector<8x1xf32>
      %50 = vector.broadcast %49 : vector<8x1xf32> to vector<8x32xf32>
      %51 = arith.subf %41, %50 : vector<8x32xf32>
      %52 = arith.mulf %51, %51 : vector<8x32xf32>
      %cst_30 = arith.constant dense<0.000000e+00> : vector<8xf32>
      %53 = vector.multi_reduction <add>, %52, %cst_30 [1] : vector<8x32xf32> to vector<8xf32>
      %54 = vector.shape_cast %53 : vector<8xf32> to vector<8x1xf32>
      %cst_31 = arith.constant 3.200000e+01 : f32
      %55 = vector.broadcast %cst_31 : f32 to vector<8x1xf32>
      %56 = arith.divf %54, %55 : vector<8x1xf32>
      %57 = vector.broadcast %49 : vector<8x1xf32> to vector<8x32xf32>
      %58 = arith.subf %41, %57 : vector<8x32xf32>
      %cst_32 = arith.constant 9.99999974E-6 : f32
      %59 = vector.broadcast %cst_32 : f32 to vector<8x1xf32>
      %60 = arith.addf %56, %59 : vector<8x1xf32>
      %61 = math.rsqrt %60 : vector<8x1xf32>
      %62 = vector.broadcast %61 : vector<8x1xf32> to vector<8x32xf32>
      %63 = arith.mulf %58, %62 : vector<8x32xf32>
      %64 = vector.shape_cast %43 : vector<32xf32> to vector<1x32xf32>
      %65 = vector.broadcast %64 : vector<1x32xf32> to vector<8x32xf32>
      %66 = arith.mulf %63, %65 : vector<8x32xf32>
      %67 = vector.shape_cast %45 : vector<32xf32> to vector<1x32xf32>
      %68 = vector.broadcast %67 : vector<1x32xf32> to vector<8x32xf32>
      %69 = arith.addf %66, %68 : vector<8x32xf32>
      %70 = arith.truncf %69 : vector<8x32xf32> to vector<8x32xbf16>
      %c0_33 = arith.constant 0 : index
      %c0_34 = arith.constant 0 : index
      %71 = vector.load %arg15[%c0_33, %c0_34] : memref<8x32xbf16, #tpu.memory_space<vmem>>, vector<8x32xbf16>
      tpu.vector_store %arg15[%c0_33, %c0_34], %70 {strides = array<i32>} : memref<8x32xbf16, #tpu.memory_space<vmem>>, vector<8x32xbf16>,
      %cst_35 = arith.constant 0.000000e+00 : f32
      %72 = vector.broadcast %cst_35 : f32 to vector<8x32xf32>
      %c0_36 = arith.constant 0 : index
      %c0_37 = arith.constant 0 : index
      %73 = vector.load %arg16[%c0_36, %c0_37] : memref<8x32xf32, #tpu.memory_space<vmem>>, vector<8x32xf32>
      tpu.vector_store %arg16[%c0_36, %c0_37], %72 {strides = array<i32>} : memref<8x32xf32, #tpu.memory_space<vmem>>, vector<8x32xf32>,
      %74 = tpu.iota {dimensions = array<i32: 0>} : vector<8x8xi32>
      %75 = tpu.iota {dimensions = array<i32: 1>} : vector<8x8xi32>
      %76 = arith.cmpi sge, %74, %75 : vector<8x8xi32>
      %cst_38 = arith.constant 0.000000e+00 : f32
      %cst_39 = arith.constant -1.000000e+30 : f32
      %77 = vector.broadcast %cst_38 : f32 to vector<8x8xf32>
      %78 = vector.broadcast %cst_39 : f32 to vector<8x8xf32>
      %79 = arith.select %76, %77, %78 : vector<8x8xi1>, vector<8x8xf32>
      %c0_40 = arith.constant 0 : index
      %c0_41 = arith.constant 0 : index
      %80 = vector.load %arg17[%c0_40, %c0_41] : memref<8x8xf32, #tpu.memory_space<vmem>>, vector<8x8xf32>
      tpu.vector_store %arg17[%c0_40, %c0_41], %79 {strides = array<i32>} : memref<8x8xf32, #tpu.memory_space<vmem>>, vector<8x8xf32>,
    } else {
    }
    %c0 = arith.constant 0 : index
    %c0_1 = arith.constant 0 : index
    %3 = vector.load %arg15[%c0, %c0_1] : memref<8x32xbf16, #tpu.memory_space<vmem>>, vector<8x32xbf16>
    %c0_2 = arith.constant 0 : index
    %c0_3 = arith.constant 0 : index
    %c0_4 = arith.constant 0 : index
    %4 = vector.load %arg5[%c0_2, %c0_3, %c0_4] : memref<1x32x24xbf16, #tpu.memory_space<vmem>>, vector<1x32x24xbf16>
    %5 = vector.shape_cast %4 : vector<1x32x24xbf16> to vector<32x24xbf16>
    %cst = arith.constant dense<0.000000e+00> : vector<8x24xf32>
    %6 = tpu.matmul %3, %5, %cst {dimension_numbers = #tpu.dot_dimension_numbers<[1], [0], [0], [1], [0, 0, 1, 1], [], []>} : vector<8x32xbf16>, vector<32x24xbf16>, vector<8x24xf32> -> vector<8x24xf32>
    %7 = vector.extract_strided_slice %6 {offsets = [0, 0], sizes = [8, 8], strides = [1, 1]} : vector<8x24xf32> to vector<8x8xf32>
    %8 = arith.truncf %7 : vector<8x8xf32> to vector<8x8xbf16>
    %9 = vector.extract_strided_slice %6 {offsets = [0, 8], sizes = [8, 8], strides = [1, 1]} : vector<8x24xf32> to vector<8x8xf32>
    %10 = arith.truncf %9 : vector<8x8xf32> to vector<8x8xbf16>
    %11 = vector.extract_strided_slice %6 {offsets = [0, 16], sizes = [8, 8], strides = [1, 1]} : vector<8x24xf32> to vector<8x8xf32>
    %12 = arith.truncf %11 : vector<8x8xf32> to vector<8x8xbf16>
    "tpu.trace_start"() <{level = 10 : i32, message = "qd,kd->qk"}> : () -> ()
    %cst_5 = arith.constant dense<0.000000e+00> : vector<8x8xf32>
    %13 = tpu.matmul %8, %10, %cst_5 {dimension_numbers = #tpu.dot_dimension_numbers<[1], [1], [0], [0], [0, 0, 1, 0], [], []>} : vector<8x8xbf16>, vector<8x8xbf16>, vector<8x8xf32> -> vector<8x8xf32>
    "tpu.trace_stop"() : () -> ()
    %cst_6 = arith.constant 0.176776692 : f32
    %14 = vector.broadcast %cst_6 : f32 to vector<8x8xf32>
    %15 = arith.mulf %13, %14 : vector<8x8xf32>
    %c0_7 = arith.constant 0 : index
    %c0_8 = arith.constant 0 : index
    %16 = vector.load %arg17[%c0_7, %c0_8] : memref<8x8xf32, #tpu.memory_space<vmem>>, vector<8x8xf32>
    %17 = arith.addf %15, %16 : vector<8x8xf32>
    %cst_9 = arith.constant dense<0xFF800000> : vector<8xf32>
    %18 = vector.multi_reduction <maximumf>, %17, %cst_9 [1] : vector<8x8xf32> to vector<8xf32>
    %19 = vector.shape_cast %18 : vector<8xf32> to vector<8x1xf32>
    %20 = vector.broadcast %19 : vector<8x1xf32> to vector<8x8xf32>
    %21 = arith.subf %17, %20 : vector<8x8xf32>
    %22 = math.exp %21 : vector<8x8xf32>
    %cst_10 = arith.constant dense<0.000000e+00> : vector<8xf32>
    %23 = vector.multi_reduction <add>, %22, %cst_10 [1] : vector<8x8xf32> to vector<8xf32>
    %24 = vector.shape_cast %23 : vector<8xf32> to vector<8x1xf32>
    %25 = tpu.reciprocal %24 {approx = true} : vector<8x1xf32> -> vector<8x1xf32>
    %26 = vector.broadcast %25 : vector<8x1xf32> to vector<8x8xf32>
    %27 = arith.mulf %22, %26 : vector<8x8xf32>
    %28 = arith.truncf %27 : vector<8x8xf32> to vector<8x8xbf16>
    %cst_11 = arith.constant dense<0.000000e+00> : vector<8x8xf32>
    %29 = tpu.matmul %28, %12, %cst_11 {dimension_numbers = #tpu.dot_dimension_numbers<[1], [0], [0], [1], [0, 0, 1, 1], [], []>} : vector<8x8xbf16>, vector<8x8xbf16>, vector<8x8xf32> -> vector<8x8xf32>
    %c0_12 = arith.constant 0 : index
    %c0_13 = arith.constant 0 : index
    %30 = vector.load %arg16[%c0_12, %c0_13] : memref<8x32xf32, #tpu.memory_space<vmem>>, vector<8x32xf32>
    %31 = arith.truncf %29 : vector<8x8xf32> to vector<8x8xbf16>
    %c0_14 = arith.constant 0 : index
    %c0_15 = arith.constant 0 : index
    %c0_16 = arith.constant 0 : index
    %32 = vector.load %arg6[%c0_14, %c0_15, %c0_16] : memref<1x8x32xbf16, #tpu.memory_space<vmem>>, vector<1x8x32xbf16>
    %33 = vector.shape_cast %32 : vector<1x8x32xbf16> to vector<8x32xbf16>
    %cst_17 = arith.constant dense<0.000000e+00> : vector<8x32xf32>
    %34 = tpu.matmul %31, %33, %cst_17 {dimension_numbers = #tpu.dot_dimension_numbers<[1], [0], [0], [1], [0, 0, 1, 1], [], []>} : vector<8x8xbf16>, vector<8x32xbf16>, vector<8x32xf32> -> vector<8x32xf32>
    %35 = arith.addf %30, %34 : vector<8x32xf32>
    %c0_18 = arith.constant 0 : index
    %c0_19 = arith.constant 0 : index
    %36 = vector.load %arg16[%c0_18, %c0_19] : memref<8x32xf32, #tpu.memory_space<vmem>>, vector<8x32xf32>
    tpu.vector_store %arg16[%c0_18, %c0_19], %35 {strides = array<i32>} : memref<8x32xf32, #tpu.memory_space<vmem>>, vector<8x32xf32>,
    %c3_i32 = arith.constant 3 : i32
    %37 = arith.cmpi eq, %arg1, %c3_i32 : i32
    %38 = arith.extui %37 : i1 to i32
    %c0_i32_20 = arith.constant 0 : i32
    %39 = arith.cmpi ne, %38, %c0_i32_20 : i32
    scf.if %39 {
      %c0_21 = arith.constant 0 : index
      %c0_22 = arith.constant 0 : index
      %c0_23 = arith.constant 0 : index
      %40 = vector.load %arg2[%c0_21, %c0_22, %c0_23] : memref<1x8x32xf32, #tpu.memory_space<vmem>>, vector<1x8x32xf32>
      %41 = vector.shape_cast %40 : vector<1x8x32xf32> to vector<8x32xf32>
      %c0_24 = arith.constant 0 : index
      %c0_25 = arith.constant 0 : index
      %42 = vector.load %arg16[%c0_24, %c0_25] : memref<8x32xf32, #tpu.memory_space<vmem>>, vector<8x32xf32>
      %43 = arith.addf %41, %42 : vector<8x32xf32>
      %c0_26 = arith.constant 0 : index
      %c0_27 = arith.constant 0 : index
      %44 = vector.load %arg7[%c0_26, %c0_27] : memref<1x32xf32, #tpu.memory_space<vmem>>, vector<1x32xf32>
      %45 = vector.shape_cast %44 : vector<1x32xf32> to vector<32xf32>
      %46 = vector.shape_cast %45 : vector<32xf32> to vector<1x32xf32>
      %47 = vector.broadcast %46 : vector<1x32xf32> to vector<8x32xf32>
      %48 = arith.addf %43, %47 : vector<8x32xf32>
      %c0_28 = arith.constant 0 : index
      %c0_29 = arith.constant 0 : index
      %49 = vector.load %arg8[%c0_28, %c0_29] : memref<1x32xf32, #tpu.memory_space<vmem>>, vector<1x32xf32>
      %50 = vector.shape_cast %49 : vector<1x32xf32> to vector<32xf32>
      %c0_30 = arith.constant 0 : index
      %c0_31 = arith.constant 0 : index
      %51 = vector.load %arg9[%c0_30, %c0_31] : memref<1x32xf32, #tpu.memory_space<vmem>>, vector<1x32xf32>
      %52 = vector.shape_cast %51 : vector<1x32xf32> to vector<32xf32>
      %cst_32 = arith.constant dense<0.000000e+00> : vector<8xf32>
      %53 = vector.multi_reduction <add>, %48, %cst_32 [1] : vector<8x32xf32> to vector<8xf32>
      %54 = vector.shape_cast %53 : vector<8xf32> to vector<8x1xf32>
      %cst_33 = arith.constant 3.200000e+01 : f32
      %55 = vector.broadcast %cst_33 : f32 to vector<8x1xf32>
      %56 = arith.divf %54, %55 : vector<8x1xf32>
      %57 = vector.broadcast %56 : vector<8x1xf32> to vector<8x32xf32>
      %58 = arith.subf %48, %57 : vector<8x32xf32>
      %59 = arith.mulf %58, %58 : vector<8x32xf32>
      %cst_34 = arith.constant dense<0.000000e+00> : vector<8xf32>
      %60 = vector.multi_reduction <add>, %59, %cst_34 [1] : vector<8x32xf32> to vector<8xf32>
      %61 = vector.shape_cast %60 : vector<8xf32> to vector<8x1xf32>
      %cst_35 = arith.constant 3.200000e+01 : f32
      %62 = vector.broadcast %cst_35 : f32 to vector<8x1xf32>
      %63 = arith.divf %61, %62 : vector<8x1xf32>
      %64 = vector.broadcast %56 : vector<8x1xf32> to vector<8x32xf32>
      %65 = arith.subf %48, %64 : vector<8x32xf32>
      %cst_36 = arith.constant 9.99999974E-6 : f32
      %66 = vector.broadcast %cst_36 : f32 to vector<8x1xf32>
      %67 = arith.addf %63, %66 : vector<8x1xf32>
      %68 = math.rsqrt %67 : vector<8x1xf32>
      %69 = vector.broadcast %68 : vector<8x1xf32> to vector<8x32xf32>
      %70 = arith.mulf %65, %69 : vector<8x32xf32>
      %71 = vector.shape_cast %50 : vector<32xf32> to vector<1x32xf32>
      %72 = vector.broadcast %71 : vector<1x32xf32> to vector<8x32xf32>
      %73 = arith.mulf %70, %72 : vector<8x32xf32>
      %74 = vector.shape_cast %52 : vector<32xf32> to vector<1x32xf32>
      %75 = vector.broadcast %74 : vector<1x32xf32> to vector<8x32xf32>
      %76 = arith.addf %73, %75 : vector<8x32xf32>
      %77 = arith.truncf %76 : vector<8x32xf32> to vector<8x32xbf16>
      %cst_37 = arith.constant 0.000000e+00 : f32
      %78 = vector.broadcast %cst_37 : f32 to vector<8x32xf32>
      %c0_38 = arith.constant 0 : index
      %c0_39 = arith.constant 0 : index
      %79 = vector.load %arg10[%c0_38, %c0_39] : memref<32x128xbf16, #tpu.memory_space<vmem>>, vector<32x128xbf16>
      %cst_40 = arith.constant dense<0.000000e+00> : vector<8x128xf32>
      %80 = tpu.matmul %77, %79, %cst_40 {dimension_numbers = #tpu.dot_dimension_numbers<[1], [0], [0], [1], [0, 0, 1, 1], [], []>} : vector<8x32xbf16>, vector<32x128xbf16>, vector<8x128xf32> -> vector<8x128xf32>
      %c0_41 = arith.constant 0 : index
      %c0_42 = arith.constant 0 : index
      %81 = vector.load %arg11[%c0_41, %c0_42] : memref<1x128xf32, #tpu.memory_space<vmem>>, vector<1x128xf32>
      %82 = vector.shape_cast %81 : vector<1x128xf32> to vector<128xf32>
      %83 = vector.shape_cast %82 : vector<128xf32> to vector<1x128xf32>
      %84 = vector.broadcast %83 : vector<1x128xf32> to vector<8x128xf32>
      %85 = arith.addf %80, %84 : vector<8x128xf32>
      %cst_43 = arith.constant 0.000000e+00 : f32
      %86 = vector.broadcast %cst_43 : f32 to vector<8x128xf32>
      %87 = arith.maximumf %85, %86 : vector<8x128xf32>
      %88 = arith.truncf %87 : vector<8x128xf32> to vector<8x128xbf16>
      %c0_44 = arith.constant 0 : index
      %c0_45 = arith.constant 0 : index
      %89 = vector.load %arg12[%c0_44, %c0_45] : memref<128x32xbf16, #tpu.memory_space<vmem>>, vector<128x32xbf16>
      %cst_46 = arith.constant dense<0.000000e+00> : vector<8x32xf32>
      %90 = tpu.matmul %88, %89, %cst_46 {dimension_numbers = #tpu.dot_dimension_numbers<[1], [0], [0], [1], [0, 0, 1, 1], [], []>} : vector<8x128xbf16>, vector<128x32xbf16>, vector<8x32xf32> -> vector<8x32xf32>
      %91 = arith.addf %78, %90 : vector<8x32xf32>
      %c0_47 = arith.constant 0 : index
      %c0_48 = arith.constant 0 : index
      %92 = vector.load %arg13[%c0_47, %c0_48] : memref<1x32xf32, #tpu.memory_space<vmem>>, vector<1x32xf32>
      %93 = vector.shape_cast %92 : vector<1x32xf32> to vector<32xf32>
      %94 = vector.shape_cast %93 : vector<32xf32> to vector<1x32xf32>
      %95 = vector.broadcast %94 : vector<1x32xf32> to vector<8x32xf32>
      %96 = arith.addf %91, %95 : vector<8x32xf32>
      %97 = arith.addf %48, %96 : vector<8x32xf32>
      %c0_49 = arith.constant 0 : index
      %c0_50 = arith.constant 0 : index
      %c0_51 = arith.constant 0 : index
      %98 = vector.load %arg14[%c0_49, %c0_50, %c0_51] : memref<1x8x32xf32, #tpu.memory_space<vmem>>, vector<1x8x32xf32>
      %99 = vector.shape_cast %98 : vector<1x8x32xf32> to vector<8x32xf32>
      %100 = vector.shape_cast %97 : vector<8x32xf32> to vector<1x8x32xf32>
      tpu.vector_store %arg14[%c0_49, %c0_50, %c0_51], %100 {strides = array<i32>} : memref<1x8x32xf32, #tpu.memory_space<vmem>>, vector<1x8x32xf32>,
    } else {
    }
    return
  }
  func.func @transform_0(%arg0: i32, %arg1: i32) -> (i32, i32, i32) {
    %c0_i32 = arith.constant 0 : i32
    %c0_i32_0 = arith.constant 0 : i32
    %c0_i32_1 = arith.constant 0 : i32
    return %arg0, %c0_i32, %c0_i32_0 : i32, i32, i32
  }
  func.func @transform_1(%arg0: i32, %arg1: i32) -> (i32, i32) {
    %c0_i32 = arith.constant 0 : i32
    %c0_i32_0 = arith.constant 0 : i32
    %c0_i32_1 = arith.constant 0 : i32
    return %c0_i32, %c0_i32_0 : i32, i32
  }
  func.func @transform_2(%arg0: i32, %arg1: i32) -> (i32, i32) {
    %c0_i32 = arith.constant 0 : i32
    %c0_i32_0 = arith.constant 0 : i32
    %c0_i32_1 = arith.constant 0 : i32
    return %c0_i32, %c0_i32_0 : i32, i32
  }
  func.func @transform_3(%arg0: i32, %arg1: i32) -> (i32, i32, i32) {
    %c0_i32 = arith.constant 0 : i32
    %c0_i32_0 = arith.constant 0 : i32
    %c0_i32_1 = arith.constant 0 : i32
    return %arg1, %c0_i32, %c0_i32_0 : i32, i32, i32
  }
  func.func @transform_4(%arg0: i32, %arg1: i32) -> (i32, i32, i32) {
    %c0_i32 = arith.constant 0 : i32
    %c0_i32_0 = arith.constant 0 : i32
    %c0_i32_1 = arith.constant 0 : i32
    return %arg1, %c0_i32, %c0_i32_0 : i32, i32, i32
  }
  func.func @transform_5(%arg0: i32, %arg1: i32) -> (i32, i32) {
    %c0_i32 = arith.constant 0 : i32
    %c0_i32_0 = arith.constant 0 : i32
    %c0_i32_1 = arith.constant 0 : i32
    return %c0_i32, %c0_i32_0 : i32, i32
  }
  func.func @transform_6(%arg0: i32, %arg1: i32) -> (i32, i32) {
    %c0_i32 = arith.constant 0 : i32
    %c0_i32_0 = arith.constant 0 : i32
    %c0_i32_1 = arith.constant 0 : i32
    return %c0_i32, %c0_i32_0 : i32, i32
  }
  func.func @transform_7(%arg0: i32, %arg1: i32) -> (i32, i32) {
    %c0_i32 = arith.constant 0 : i32
    %c0_i32_0 = arith.constant 0 : i32
    %c0_i32_1 = arith.constant 0 : i32
    return %c0_i32, %c0_i32_0 : i32, i32
  }
  func.func @transform_8(%arg0: i32, %arg1: i32) -> (i32, i32) {
    %c0_i32 = arith.constant 0 : i32
    %c0_i32_0 = arith.constant 0 : i32
    %c0_i32_1 = arith.constant 0 : i32
    return %c0_i32, %c0_i32_0 : i32, i32
  }
  func.func @transform_9(%arg0: i32, %arg1: i32) -> (i32, i32) {
    %c0_i32 = arith.constant 0 : i32
    %c0_i32_0 = arith.constant 0 : i32
    %c0_i32_1 = arith.constant 0 : i32
    return %c0_i32, %c0_i32_0 : i32, i32
  }
  func.func @transform_10(%arg0: i32, %arg1: i32) -> (i32, i32) {
    %c0_i32 = arith.constant 0 : i32
    %c0_i32_0 = arith.constant 0 : i32
    %c0_i32_1 = arith.constant 0 : i32
    return %c0_i32, %c0_i32_0 : i32, i32
  }
  func.func @transform_11(%arg0: i32, %arg1: i32) -> (i32, i32) {
    %c0_i32 = arith.constant 0 : i32
    %c0_i32_0 = arith.constant 0 : i32
    %c0_i32_1 = arith.constant 0 : i32
    return %c0_i32, %c0_i32_0 : i32, i32
  }
  func.func @transform_12(%arg0: i32, %arg1: i32) -> (i32, i32, i32) {
    %c0_i32 = arith.constant 0 : i32
    %c0_i32_0 = arith.constant 0 : i32
    %c0_i32_1 = arith.constant 0 : i32
    return %arg0, %c0_i32, %c0_i32_0 : i32, i32, i32
  }
}

</mosaic_0001>

<llo_original>
// kernel: tpu_custom_call.1
$region0: #{tpu_custom_call.1}
  #allocation0 [shape = 'u32[]', space=smem, size = 0x4, offset = 0x4, fixed_abs, tag = 'smem constant byte address 0x4 - core index']
  #allocation1 [shape = 'u32[144,128]{1,0:T(1,128)}', space=vmem, size = 0x12000, scoped, tag = 'internal scratch']
  #allocation2 [shape = 'bf16[8,32]{1,0:T(8,128)(2,1)}', space=vmem, size = 0x800, scoped, tag = 'scratch operand']
  #allocation3 [shape = 'f32[8,32]{1,0:T(8,128)}', space=vmem, size = 0x1000, scoped, tag = 'scratch operand']
  #allocation4 [shape = 'f32[8,8]{1,0:T(8,128)}', space=vmem, size = 0x1000, scoped, tag = 'scratch operand']
  %s0 = inlined_call_operand.hbm [shape: f32[2,8,32], index: 0, kind: input, shape index: {}]
  %s1 = inlined_call_operand.hbm [shape: f32[1,32], index: 1, kind: input, shape index: {}]
  %s2 = inlined_call_operand.hbm [shape: f32[1,32], index: 2, kind: input, shape index: {}]
  %s3 = inlined_call_operand.hbm [shape: bf16[4,32,24], index: 3, kind: input, shape index: {}]
  %s4 = inlined_call_operand.hbm [shape: bf16[4,8,32], index: 4, kind: input, shape index: {}]
  %s5 = inlined_call_operand.hbm [shape: f32[1,32], index: 5, kind: input, shape index: {}]
  %s6 = inlined_call_operand.hbm [shape: f32[1,32], index: 6, kind: input, shape index: {}]
  %s7 = inlined_call_operand.hbm [shape: f32[1,32], index: 7, kind: input, shape index: {}]
  %s8 = inlined_call_operand.hbm [shape: bf16[32,128], index: 8, kind: input, shape index: {}]
  %s9 = inlined_call_operand.hbm [shape: f32[1,128], index: 9, kind: input, shape index: {}]
  %s10 = inlined_call_operand.hbm [shape: bf16[128,32], index: 10, kind: input, shape index: {}]
  %s11 = inlined_call_operand.hbm [shape: f32[1,32], index: 11, kind: input, shape index: {}]
  %s12 = inlined_call_operand.hbm [shape: f32[2,8,32], index: 12, kind: output, shape index: {}]
  %s13 = sld [smem:[#allocation0]]
  $region137: #{tpu_custom_call.1} parent=0
    _
  %s15 = ssub.s32 1, %s13
  %s16 = scalar_select 0, %s15, %s13
  $region1: #{tpu_custom_call.1} parent=0
    #allocation5 [shape = 'u8[8192]{0}', space=vmem, size = 0x2000, scoped, tag = 'input window, operand 0']
    #allocation6 [shape = 's32[2]{0}', space=sflag, size = 0x8, scoped, tag = 'scoped memory for tpu_custom_call.1']
    #allocation7 [shape = 's32[2]{0}', space=sflag, size = 0x8, scoped, tag = 'scoped memory for tpu_custom_call.1']
    #allocation8 [shape = 'u8[512]{0}', space=vmem, size = 0x400, scoped, tag = 'input window, operand 1, single buffered']
    #allocation9 [shape = 's32[1]{0}', space=sflag, size = 0x4, scoped, tag = 'scoped memory for tpu_custom_call.1']
    #allocation10 [shape = 'u8[512]{0}', space=vmem, size = 0x400, scoped, tag = 'input window, operand 2, single buffered']
    #allocation11 [shape = 'u8[16384]{0}', space=vmem, size = 0x4000, scoped, tag = 'input window, operand 3']
    #allocation12 [shape = 's32[2]{0}', space=sflag, size = 0x8, scoped, tag = 'scoped memory for tpu_custom_call.1']
    #allocation13 [shape = 'u8[4096]{0}', space=vmem, size = 0x1000, scoped, tag = 'input window, operand 4']
    #allocation14 [shape = 'u8[512]{0}', space=vmem, size = 0x400, scoped, tag = 'input window, operand 5, single buffered']
    #allocation15 [shape = 's32[1]{0}', space=sflag, size = 0x4, scoped, tag = 'scoped memory for tpu_custom_call.1']
    #allocation16 [shape = 'u8[512]{0}', space=vmem, size = 0x400, scoped, tag = 'input window, operand 6, single buffered']
    #allocation17 [shape = 'u8[512]{0}', space=vmem, size = 0x400, scoped, tag = 'input window, operand 7, single buffered']
    #allocation18 [shape = 's32[1]{0}', space=sflag, size = 0x4, scoped, tag = 'scoped memory for tpu_custom_call.1']
    #allocation19 [shape = 'u8[8192]{0}', space=vmem, size = 0x2000, scoped, tag = 'input window, operand 8, single buffered']
    #allocation20 [shape = 'u8[512]{0}', space=vmem, size = 0x400, scoped, tag = 'input window, operand 9, single buffered']
    #allocation21 [shape = 's32[1]{0}', space=sflag, size = 0x4, scoped, tag = 'scoped memory for tpu_custom_call.1']
    #allocation22 [shape = 'u8[32768]{0}', space=vmem, size = 0x8000, scoped, tag = 'input window, operand 10, single buffered']
    #allocation23 [shape = 'u8[512]{0}', space=vmem, size = 0x400, scoped, tag = 'input window, operand 11, single buffered']
    #allocation24 [shape = 's32[1]{0}', space=sflag, size = 0x4, scoped, tag = 'scoped memory for tpu_custom_call.1']
    #allocation25 [shape = 'u8[8192]{0}', space=vmem, size = 0x2000, scoped, tag = 'output window, operand 0']
    %17 = vsyncpa [#allocation6], 0
    %s18 = scalar_lea.sflag [#allocation6], 1
    %19 = vsyncpa %s18, 0
    %20 = vsyncpa [#allocation9], 0
    %21 = vsyncpa [#allocation12], 0
    %s22 = scalar_lea.sflag [#allocation12], 1
    %23 = vsyncpa %s22, 0
    %24 = vsyncpa [#allocation15], 0
    %25 = vsyncpa [#allocation18], 0
    %26 = vsyncpa [#allocation21], 0
    %27 = vsyncpa [#allocation24], 0
    %28 = vsyncpa [#allocation7], 0
    %s29 = scalar_lea.sflag [#allocation7], 1
    %30 = vsyncpa %s29, 0
    loop: start=0, step=1, limit=10
    $region2: #{tpu_custom_call.1} parent=1 // loop_pre_header
      _
    $region3: #{tpu_custom_call.1} parent=1 // loop_header
      %s32 = sphi 0, %s36
      %p33 = scmp.ge.s32.totalorder %s32, 10
      %s39 = sphi 0, %s51
      %s40 = sphi 0, %s47
      %s41 = sphi 0, %s39
      %s42 = sphi 0, %s40
      %s43 = sphi 0, %s41
      %s44 = sphi 0, %s42
      %s54 = sphi 0, %s56
      %s57 = sphi 0, %s54
      %s58 = sphi 0, %s57
      %s74 = sphi 0, %s58
      %s78 = sphi 0, %s78
      %s80 = sphi 0, %s78
      %s81 = sphi 0, %s80
      %s95 = sphi 0, %s81
      %s99 = sphi 0, %s99
      %s101 = sphi 0, %s99
      %s102 = sphi 0, %s101
      %s116 = sphi 0, %s102
      %s122 = sphi 0, %s124
      %s125 = sphi 0, %s122
      %s126 = sphi 0, %s125
      %s142 = sphi 0, %s126
      %s148 = sphi 0, %s150
      %s151 = sphi 0, %s148
      %s152 = sphi 0, %s151
      %s168 = sphi 0, %s152
      %s172 = sphi 0, %s172
      %s174 = sphi 0, %s172
      %s175 = sphi 0, %s174
      %s189 = sphi 0, %s175
      %s193 = sphi 0, %s193
      %s195 = sphi 0, %s193
      %s196 = sphi 0, %s195
      %s210 = sphi 0, %s196
      %s214 = sphi 0, %s214
      %s216 = sphi 0, %s214
      %s217 = sphi 0, %s216
      %s231 = sphi 0, %s217
      %s235 = sphi 0, %s235
      %s237 = sphi 0, %s235
      %s238 = sphi 0, %s237
      %s252 = sphi 0, %s238
      %s256 = sphi 0, %s256
      %s258 = sphi 0, %s256
      %s259 = sphi 0, %s258
      %s273 = sphi 0, %s259
      %s277 = sphi 0, %s277
      %s279 = sphi 0, %s277
      %s280 = sphi 0, %s279
      %s294 = sphi 0, %s280
      %s298 = sphi 0, %s298
      %s300 = sphi 0, %s298
      %s301 = sphi 0, %s300
      %s315 = sphi 0, %s301
      %s321 = sphi 0, %s323
      %s324 = sphi 0, %s321
      %s325 = sphi 0, %s324
      %s341 = sphi 0, %s325
    $region4: #{tpu_custom_call.1} parent=1 // loop_header_branch
      %35 = sbr.rel (%p33) target = $region8
    $region5: #{tpu_custom_call.1} parent=1 // loop_body
      %s37 = ssub.s32 %s32, 1
      %s38 = ssub.s32 %s32, 2
      %s45 = sadd.s32 1, %s40
      %p46 = scmp.ge.s32.totalorder %s45, 4
      %s47 = scalar_select %p46, 0, %s45
      %s48 = sadd.s32 1, %s39
      %s49 = scalar_select %p46, %s48, %s39
      %p50 = scmp.ge.s32.totalorder %s49, 2
      %s51 = scalar_select %p50, 0, %s49
      %s52 = ssub.s32 %s39, %s51
      %p53 = scmp.eq.s32.totalorder %s52, 0
      %s55 = sadd.s32 %s54, 1
      %s56 = scalar_select %p53, %s54, %s55
      %p59 = pneg %p53
      %p60 = scmp.eq.s32.totalorder %s32, 7
      %p61 = por %p59, %p60
      %p62 = scmp.ne.s32.totalorder %s54, %s57
      %p63 = scmp.eq.s32.totalorder %s32, 0
      %p64 = por %p62, %p63
      %p65 = scmp.ne.s32.totalorder %s54, %s57
      %p66 = scmp.eq.s32.totalorder %s37, 7
      %p67 = por %p65, %p66
      %p68 = scmp.ne.s32.totalorder %s57, %s58
      %p69 = scmp.eq.s32.totalorder %s37, 0
      %p70 = por %p68, %p69
      %p71 = scmp.ne.s32.totalorder %s57, %s58
      %p72 = scmp.eq.s32.totalorder %s38, 7
      %p73 = por %p71, %p72
      %p75 = scmp.ne.s32.totalorder %s58, %s74
      %p76 = scmp.eq.s32.totalorder %s38, 0
      %p77 = por %p75, %p76
      %s79 = sadd.s32 %s78, 1
      %p82 = scmp.eq.s32.totalorder %s32, 7
      %p83 = scmp.ne.s32.totalorder %s78, %s80
      %p84 = scmp.eq.s32.totalorder %s32, 0
      %p85 = por %p83, %p84
      %p86 = scmp.ne.s32.totalorder %s78, %s80
      %p87 = scmp.eq.s32.totalorder %s37, 7
      %p88 = por %p86, %p87
      %p89 = scmp.ne.s32.totalorder %s80, %s81
      %p90 = scmp.eq.s32.totalorder %s37, 0
      %p91 = por %p89, %p90
      %p92 = scmp.ne.s32.totalorder %s80, %s81
      %p93 = scmp.eq.s32.totalorder %s38, 7
      %p94 = por %p92, %p93
      %p96 = scmp.ne.s32.totalorder %s81, %s95
      %p97 = scmp.eq.s32.totalorder %s38, 0
      %p98 = por %p96, %p97
      %s100 = sadd.s32 %s99, 1
      %p103 = scmp.eq.s32.totalorder %s32, 7
      %p104 = scmp.ne.s32.totalorder %s99, %s101
      %p105 = scmp.eq.s32.totalorder %s32, 0
      %p106 = por %p104, %p105
      %p107 = scmp.ne.s32.totalorder %s99, %s101
      %p108 = scmp.eq.s32.totalorder %s37, 7
      %p109 = por %p107, %p108
      %p110 = scmp.ne.s32.totalorder %s101, %s102
      %p111 = scmp.eq.s32.totalorder %s37, 0
      %p112 = por %p110, %p111
      %p113 = scmp.ne.s32.totalorder %s101, %s102
      %p114 = scmp.eq.s32.totalorder %s38, 7
      %p115 = por %p113, %p114
      %p117 = scmp.ne.s32.totalorder %s102, %s116
      %p118 = scmp.eq.s32.totalorder %s38, 0
      %p119 = por %p117, %p118
      %s120 = ssub.s32 %s40, %s47
      %p121 = scmp.eq.s32.totalorder %s120, 0
      %s123 = sadd.s32 %s122, 1
      %s124 = scalar_select %p121, %s122, %s123
      %p127 = pneg %p121
      %p128 = scmp.eq.s32.totalorder %s32, 7
      %p129 = por %p127, %p128
      %p130 = scmp.ne.s32.totalorder %s122, %s125
      %p131 = scmp.eq.s32.totalorder %s32, 0
      %p132 = por %p130, %p131
      %p133 = scmp.ne.s32.totalorder %s122, %s125
      %p134 = scmp.eq.s32.totalorder %s37, 7
      %p135 = por %p133, %p134
      %p136 = scmp.ne.s32.totalorder %s125, %s126
      %p137 = scmp.eq.s32.totalorder %s37, 0
      %p138 = por %p136, %p137
      %p139 = scmp.ne.s32.totalorder %s125, %s126
      %p140 = scmp.eq.s32.totalorder %s38, 7
      %p141 = por %p139, %p140
      %p143 = scmp.ne.s32.totalorder %s126, %s142
      %p144 = scmp.eq.s32.totalorder %s38, 0
      %p145 = por %p143, %p144
      %s146 = ssub.s32 %s40, %s47
      %p147 = scmp.eq.s32.totalorder %s146, 0
      %s149 = sadd.s32 %s148, 1
      %s150 = scalar_select %p147, %s148, %s149
      %p153 = pneg %p147
      %p154 = scmp.eq.s32.totalorder %s32, 7
      %p155 = por %p153, %p154
      %p156 = scmp.ne.s32.totalorder %s148, %s151
      %p157 = scmp.eq.s32.totalorder %s32, 0
      %p158 = por %p156, %p157
      %p159 = scmp.ne.s32.totalorder %s148, %s151
      %p160 = scmp.eq.s32.totalorder %s37, 7
      %p161 = por %p159, %p160
      %p162 = scmp.ne.s32.totalorder %s151, %s152
      %p163 = scmp.eq.s32.totalorder %s37, 0
      %p164 = por %p162, %p163
      %p165 = scmp.ne.s32.totalorder %s151, %s152
      %p166 = scmp.eq.s32.totalorder %s38, 7
      %p167 = por %p165, %p166
      %p169 = scmp.ne.s32.totalorder %s152, %s168
      %p170 = scmp.eq.s32.totalorder %s38, 0
      %p171 = por %p169, %p170
      %s173 = sadd.s32 %s172, 1
      %p176 = scmp.eq.s32.totalorder %s32, 7
      %p177 = scmp.ne.s32.totalorder %s172, %s174
      %p178 = scmp.eq.s32.totalorder %s32, 0
      %p179 = por %p177, %p178
      %p180 = scmp.ne.s32.totalorder %s172, %s174
      %p181 = scmp.eq.s32.totalorder %s37, 7
      %p182 = por %p180, %p181
      %p183 = scmp.ne.s32.totalorder %s174, %s175
      %p184 = scmp.eq.s32.totalorder %s37, 0
      %p185 = por %p183, %p184
      %p186 = scmp.ne.s32.totalorder %s174, %s175
      %p187 = scmp.eq.s32.totalorder %s38, 7
      %p188 = por %p186, %p187
      %p190 = scmp.ne.s32.totalorder %s175, %s189
      %p191 = scmp.eq.s32.totalorder %s38, 0
      %p192 = por %p190, %p191
      %s194 = sadd.s32 %s193, 1
      %p197 = scmp.eq.s32.totalorder %s32, 7
      %p198 = scmp.ne.s32.totalorder %s193, %s195
      %p199 = scmp.eq.s32.totalorder %s32, 0
      %p200 = por %p198, %p199
      %p201 = scmp.ne.s32.totalorder %s193, %s195
      %p202 = scmp.eq.s32.totalorder %s37, 7
      %p203 = por %p201, %p202
      %p204 = scmp.ne.s32.totalorder %s195, %s196
      %p205 = scmp.eq.s32.totalorder %s37, 0
      %p206 = por %p204, %p205
      %p207 = scmp.ne.s32.totalorder %s195, %s196
      %p208 = scmp.eq.s32.totalorder %s38, 7
      %p209 = por %p207, %p208
      %p211 = scmp.ne.s32.totalorder %s196, %s210
      %p212 = scmp.eq.s32.totalorder %s38, 0
      %p213 = por %p211, %p212
      %s215 = sadd.s32 %s214, 1
      %p218 = scmp.eq.s32.totalorder %s32, 7
      %p219 = scmp.ne.s32.totalorder %s214, %s216
      %p220 = scmp.eq.s32.totalorder %s32, 0
      %p221 = por %p219, %p220
      %p222 = scmp.ne.s32.totalorder %s214, %s216
      %p223 = scmp.eq.s32.totalorder %s37, 7
      %p224 = por %p222, %p223
      %p225 = scmp.ne.s32.totalorder %s216, %s217
      %p226 = scmp.eq.s32.totalorder %s37, 0
      %p227 = por %p225, %p226
      %p228 = scmp.ne.s32.totalorder %s216, %s217
      %p229 = scmp.eq.s32.totalorder %s38, 7
      %p230 = por %p228, %p229
      %p232 = scmp.ne.s32.totalorder %s217, %s231
      %p233 = scmp.eq.s32.totalorder %s38, 0
      %p234 = por %p232, %p233
      %s236 = sadd.s32 %s235, 1
      %p239 = scmp.eq.s32.totalorder %s32, 7
      %p240 = scmp.ne.s32.totalorder %s235, %s237
      %p241 = scmp.eq.s32.totalorder %s32, 0
      %p242 = por %p240, %p241
      %p243 = scmp.ne.s32.totalorder %s235, %s237
      %p244 = scmp.eq.s32.totalorder %s37, 7
      %p245 = por %p243, %p244
      %p246 = scmp.ne.s32.totalorder %s237, %s238
      %p247 = scmp.eq.s32.totalorder %s37, 0
      %p248 = por %p246, %p247
      %p249 = scmp.ne.s32.totalorder %s237, %s238
      %p250 = scmp.eq.s32.totalorder %s38, 7
      %p251 = por %p249, %p250
      %p253 = scmp.ne.s32.totalorder %s238, %s252
      %p254 = scmp.eq.s32.totalorder %s38, 0
      %p255 = por %p253, %p254
      %s257 = sadd.s32 %s256, 1
      %p260 = scmp.eq.s32.totalorder %s32, 7
      %p261 = scmp.ne.s32.totalorder %s256, %s258
      %p262 = scmp.eq.s32.totalorder %s32, 0
      %p263 = por %p261, %p262
      %p264 = scmp.ne.s32.totalorder %s256, %s258
      %p265 = scmp.eq.s32.totalorder %s37, 7
      %p266 = por %p264, %p265
      %p267 = scmp.ne.s32.totalorder %s258, %s259
      %p268 = scmp.eq.s32.totalorder %s37, 0
      %p269 = por %p267, %p268
      %p270 = scmp.ne.s32.totalorder %s258, %s259
      %p271 = scmp.eq.s32.totalorder %s38, 7
      %p272 = por %p270, %p271
      %p274 = scmp.ne.s32.totalorder %s259, %s273
      %p275 = scmp.eq.s32.totalorder %s38, 0
      %p276 = por %p274, %p275
      %s278 = sadd.s32 %s277, 1
      %p281 = scmp.eq.s32.totalorder %s32, 7
      %p282 = scmp.ne.s32.totalorder %s277, %s279
      %p283 = scmp.eq.s32.totalorder %s32, 0
      %p284 = por %p282, %p283
      %p285 = scmp.ne.s32.totalorder %s277, %s279
      %p286 = scmp.eq.s32.totalorder %s37, 7
      %p287 = por %p285, %p286
      %p288 = scmp.ne.s32.totalorder %s279, %s280
      %p289 = scmp.eq.s32.totalorder %s37, 0
      %p290 = por %p288, %p289
      %p291 = scmp.ne.s32.totalorder %s279, %s280
      %p292 = scmp.eq.s32.totalorder %s38, 7
      %p293 = por %p291, %p292
      %p295 = scmp.ne.s32.totalorder %s280, %s294
      %p296 = scmp.eq.s32.totalorder %s38, 0
      %p297 = por %p295, %p296
      %s299 = sadd.s32 %s298, 1
      %p302 = scmp.eq.s32.totalorder %s32, 7
      %p303 = scmp.ne.s32.totalorder %s298, %s300
      %p304 = scmp.eq.s32.totalorder %s32, 0
      %p305 = por %p303, %p304
      %p306 = scmp.ne.s32.totalorder %s298, %s300
      %p307 = scmp.eq.s32.totalorder %s37, 7
      %p308 = por %p306, %p307
      %p309 = scmp.ne.s32.totalorder %s300, %s301
      %p310 = scmp.eq.s32.totalorder %s37, 0
      %p311 = por %p309, %p310
      %p312 = scmp.ne.s32.totalorder %s300, %s301
      %p313 = scmp.eq.s32.totalorder %s38, 7
      %p314 = por %p312, %p313
      %p316 = scmp.ne.s32.totalorder %s301, %s315
      %p317 = scmp.eq.s32.totalorder %s38, 0
      %p318 = por %p316, %p317
      %s319 = ssub.s32 %s39, %s51
      %p320 = scmp.eq.s32.totalorder %s319, 0
      %s322 = sadd.s32 %s321, 1
      %s323 = scalar_select %p320, %s321, %s322
      %p326 = pneg %p320
      %p327 = scmp.eq.s32.totalorder %s32, 7
      %p328 = por %p326, %p327
      %p329 = scmp.ne.s32.totalorder %s321, %s324
      %p330 = scmp.eq.s32.totalorder %s32, 0
      %p331 = por %p329, %p330
      %p332 = scmp.ne.s32.totalorder %s321, %s324
      %p333 = scmp.eq.s32.totalorder %s37, 7
      %p334 = por %p332, %p333
      %p335 = scmp.ne.s32.totalorder %s324, %s325
      %p336 = scmp.eq.s32.totalorder %s37, 0
      %p337 = por %p335, %p336
      %p338 = scmp.ne.s32.totalorder %s324, %s325
      %p339 = scmp.eq.s32.totalorder %s38, 7
      %p340 = por %p338, %p339
      %p342 = scmp.ne.s32.totalorder %s325, %s341
      %p343 = scmp.eq.s32.totalorder %s38, 0
      %p344 = por %p342, %p343
      %p345 = scmp.le.s32.totalorder 1, %s32
      %p346 = scmp.lt.s32.totalorder %s32, 9
      %p347 = pnand %p345, %p346
      %p348 = pneg %p347
      // Predicated region
      $region9: #{tpu_custom_call.1} parent=5 // pred_check
        _
      $region10: #{tpu_custom_call.1} parent=5 // pred_check_branch
        %350 = sbr.rel (%p347) target = $region12
      $region11: #{tpu_custom_call.1} parent=5 // pred_region
        %s351 = ssub.s32 %s32, 1
        // Predicated region
        $region13: #{tpu_custom_call.1} parent=11 // pred_check
          %p352 = pneg %p91
        $region14: #{tpu_custom_call.1} parent=11 // pred_check_branch
          %354 = sbr.rel (%p352) target = $region16
        $region15: #{tpu_custom_call.1} parent=11 // pred_region
          %s356 = ssub.s32 16, 16
          %357 = vsyncadd [#allocation9], %s356
          %s359 = sshll.u32 [#allocation8], 4
          %s360 = int_to_ptr.vmem [resolvable:$true] %s359
          %362 = dma.hbm_to_vmem [thread:$0]  %s1, 16, %s360, [#allocation9]
        $region16: #{tpu_custom_call.1} parent=11 // pred_fallthru
          _
        // Predicated region
        $region17: #{tpu_custom_call.1} parent=11 // pred_check
          %p363 = pneg %p112
        $region18: #{tpu_custom_call.1} parent=11 // pred_check_branch
          %365 = sbr.rel (%p363) target = $region20
        $region19: #{tpu_custom_call.1} parent=11 // pred_region
          %s367 = ssub.s32 16, 16
          %368 = vsyncadd [#allocation9], %s367
          %s370 = sshll.u32 [#allocation10], 4
          %s371 = int_to_ptr.vmem [resolvable:$true] %s370
          %373 = dma.hbm_to_vmem [thread:$0]  %s2, 16, %s371, [#allocation9]
        $region20: #{tpu_custom_call.1} parent=11 // pred_fallthru
          _
        // Predicated region
        $region21: #{tpu_custom_call.1} parent=11 // pred_check
          %p374 = pneg %p185
        $region22: #{tpu_custom_call.1} parent=11 // pred_check_branch
          %376 = sbr.rel (%p374) target = $region24
        $region23: #{tpu_custom_call.1} parent=11 // pred_region
          %s378 = ssub.s32 16, 16
          %379 = vsyncadd [#allocation15], %s378
          %s381 = sshll.u32 [#allocation14], 4
          %s382 = int_to_ptr.vmem [resolvable:$true] %s381
          %384 = dma.hbm_to_vmem [thread:$0]  %s5, 16, %s382, [#allocation15]
        $region24: #{tpu_custom_call.1} parent=11 // pred_fallthru
          _
        // Predicated region
        $region25: #{tpu_custom_call.1} parent=11 // pred_check
          %p385 = pneg %p206
        $region26: #{tpu_custom_call.1} parent=11 // pred_check_branch
          %387 = sbr.rel (%p385) target = $region28
        $region27: #{tpu_custom_call.1} parent=11 // pred_region
          %s389 = ssub.s32 16, 16
          %390 = vsyncadd [#allocation15], %s389
          %s392 = sshll.u32 [#allocation16], 4
          %s393 = int_to_ptr.vmem [resolvable:$true] %s392
          %395 = dma.hbm_to_vmem [thread:$0]  %s6, 16, %s393, [#allocation15]
        $region28: #{tpu_custom_call.1} parent=11 // pred_fallthru
          _
        // Predicated region
        $region29: #{tpu_custom_call.1} parent=11 // pred_check
          %p396 = pneg %p227
        $region30: #{tpu_custom_call.1} parent=11 // pred_check_branch
          %398 = sbr.rel (%p396) target = $region32
        $region31: #{tpu_custom_call.1} parent=11 // pred_region
          %s400 = ssub.s32 16, 16
          %401 = vsyncadd [#allocation18], %s400
          %s403 = sshll.u32 [#allocation17], 4
          %s404 = int_to_ptr.vmem [resolvable:$true] %s403
          %406 = dma.hbm_to_vmem [thread:$0]  %s7, 16, %s404, [#allocation18]
        $region32: #{tpu_custom_call.1} parent=11 // pred_fallthru
          _
        // Predicated region
        $region33: #{tpu_custom_call.1} parent=11 // pred_check
          %p407 = pneg %p248
        $region34: #{tpu_custom_call.1} parent=11 // pred_check_branch
          %409 = sbr.rel (%p407) target = $region36
        $region35: #{tpu_custom_call.1} parent=11 // pred_region
          %s411 = ssub.s32 256, 256
          %412 = vsyncadd [#allocation18], %s411
          %s413 = sshll.u32 [#allocation19], 4
          %s414 = int_to_ptr.vmem [resolvable:$true] %s413
          %419 = dma.hbm_to_vmem [thread:$0]  %s8, 256, %s414, [#allocation18], 64, 64, 4
        $region36: #{tpu_custom_call.1} parent=11 // pred_fallthru
          _
        // Predicated region
        $region37: #{tpu_custom_call.1} parent=11 // pred_check
          %p420 = pneg %p269
        $region38: #{tpu_custom_call.1} parent=11 // pred_check_branch
          %422 = sbr.rel (%p420) target = $region40
        $region39: #{tpu_custom_call.1} parent=11 // pred_region
          %s424 = ssub.s32 16, 16
          %425 = vsyncadd [#allocation21], %s424
          %s427 = sshll.u32 [#allocation20], 4
          %s428 = int_to_ptr.vmem [resolvable:$true] %s427
          %430 = dma.hbm_to_vmem [thread:$0]  %s9, 16, %s428, [#allocation21]
        $region40: #{tpu_custom_call.1} parent=11 // pred_fallthru
          _
        // Predicated region
        $region41: #{tpu_custom_call.1} parent=11 // pred_check
          %p431 = pneg %p290
        $region42: #{tpu_custom_call.1} parent=11 // pred_check_branch
          %433 = sbr.rel (%p431) target = $region44
        $region43: #{tpu_custom_call.1} parent=11 // pred_region
          %s435 = ssub.s32 1024, 1024
          %436 = vsyncadd [#allocation21], %s435
          %s437 = sshll.u32 [#allocation22], 4
          %s438 = int_to_ptr.vmem [resolvable:$true] %s437
          %443 = dma.hbm_to_vmem [thread:$0]  %s10, 1024, %s438, [#allocation21], 64, 64, 4
        $region44: #{tpu_custom_call.1} parent=11 // pred_fallthru
          _
        // Predicated region
        $region45: #{tpu_custom_call.1} parent=11 // pred_check
          %p444 = pneg %p311
        $region46: #{tpu_custom_call.1} parent=11 // pred_check_branch
          %446 = sbr.rel (%p444) target = $region48
        $region47: #{tpu_custom_call.1} parent=11 // pred_region
          %s448 = ssub.s32 16, 16
          %449 = vsyncadd [#allocation24], %s448
          %s451 = sshll.u32 [#allocation23], 4
          %s452 = int_to_ptr.vmem [resolvable:$true] %s451
          %454 = dma.hbm_to_vmem [thread:$0]  %s11, 16, %s452, [#allocation24]
        $region48: #{tpu_custom_call.1} parent=11 // pred_fallthru
          _
      $region12: #{tpu_custom_call.1} parent=5 // pred_fallthru
        _
      %p455 = scmp.lt.s32.totalorder %s32, 8
      // Predicated region
      $region49: #{tpu_custom_call.1} parent=5 // pred_check
        %p456 = pneg %p455
      $region50: #{tpu_custom_call.1} parent=5 // pred_check_branch
        %458 = sbr.rel (%p456) target = $region52
      $region51: #{tpu_custom_call.1} parent=5 // pred_region
        // Predicated region
        $region53: #{tpu_custom_call.1} parent=51 // pred_check
          %p459 = pneg %p64
        $region54: #{tpu_custom_call.1} parent=51 // pred_check_branch
          %461 = sbr.rel (%p459) target = $region56
        $region55: #{tpu_custom_call.1} parent=51 // pred_region
          %s462 = sand.u32 %s54, 1
          %s463 = scalar_lea.sflag [#allocation6], %s462
          %s464 = sand.u32 %s54, 1
          %s465 = smul.addr %s464, 8
          %s466 = scalar_lea.vmem [#allocation5], %s465
          %s468 = ssub.s32 128, 128
          %469 = vsyncadd %s463, %s468
          %s470 = smul.addr %s39, 128
          %s471 = scalar_lea.hbm %s0, %s470
          %s473 = sshll.u32 %s466, 4
          %s474 = int_to_ptr.vmem [resolvable:$true] %s473
          %476 = dma.hbm_to_vmem [thread:$0]  %s471, 128, %s474, %s463
        $region56: #{tpu_custom_call.1} parent=51 // pred_fallthru
          _
        // Predicated region
        $region57: #{tpu_custom_call.1} parent=51 // pred_check
          %p477 = pneg %p132
        $region58: #{tpu_custom_call.1} parent=51 // pred_check_branch
          %479 = sbr.rel (%p477) target = $region60
        $region59: #{tpu_custom_call.1} parent=51 // pred_region
          %s480 = sand.u32 %s32, 1
          %s481 = scalar_lea.sflag [#allocation12], %s480
          %s482 = sand.u32 %s122, 1
          %s483 = smul.addr %s482, 16
          %s484 = scalar_lea.vmem [#allocation11], %s483
          %s486 = ssub.s32 256, 256
          %487 = vsyncadd %s481, %s486
          %s488 = smul.addr %s40, 4
          %s489 = smul.addr %s488, 64
          %s490 = scalar_lea.hbm %s3, %s489
          %s491 = sshll.u32 %s484, 4
          %s492 = int_to_ptr.vmem [resolvable:$true] %s491
          %497 = dma.hbm_to_vmem [thread:$0]  %s490, 256, %s492, %s481, 64, 64, 4
        $region60: #{tpu_custom_call.1} parent=51 // pred_fallthru
          _
        // Predicated region
        $region61: #{tpu_custom_call.1} parent=51 // pred_check
          %p498 = pneg %p158
        $region62: #{tpu_custom_call.1} parent=51 // pred_check_branch
          %500 = sbr.rel (%p498) target = $region64
        $region63: #{tpu_custom_call.1} parent=51 // pred_region
          %s501 = sand.u32 %s32, 1
          %s502 = scalar_lea.sflag [#allocation12], %s501
          %s503 = sand.u32 %s148, 1
          %s504 = smul.addr %s503, 4
          %s505 = scalar_lea.vmem [#allocation13], %s504
          %s507 = ssub.s32 64, 64
          %508 = vsyncadd %s502, %s507
          %s509 = smul.addr %s40, 64
          %s510 = scalar_lea.hbm %s4, %s509
          %s512 = sshll.u32 %s505, 4
          %s513 = int_to_ptr.vmem [resolvable:$true] %s512
          %515 = dma.hbm_to_vmem [thread:$0]  %s510, 64, %s513, %s502
        $region64: #{tpu_custom_call.1} parent=51 // pred_fallthru
          _
      $region52: #{tpu_custom_call.1} parent=5 // pred_fallthru
        _
      %p516 = scmp.le.s32.totalorder 1, %s32
      %p517 = scmp.lt.s32.totalorder %s32, 9
      %p518 = pnand %p516, %p517
      %p519 = pneg %p518
      // Predicated region
      $region65: #{tpu_custom_call.1} parent=5 // pred_check
        _
      $region66: #{tpu_custom_call.1} parent=5 // pred_check_branch
        %521 = sbr.rel (%p518) target = $region68
      $region67: #{tpu_custom_call.1} parent=5 // pred_region
        %s522 = ssub.s32 %s32, 1
        %s523 = sand.u32 %s57, 1
        %s524 = scalar_lea.sflag [#allocation6], %s523
        %s525 = sand.u32 %s57, 1
        %s526 = smul.addr %s525, 8
        %s527 = scalar_lea.vmem [#allocation5], %s526
        // Predicated region
        $region69: #{tpu_custom_call.1} parent=67 // pred_check
          %p528 = pneg %p70
        $region70: #{tpu_custom_call.1} parent=67 // pred_check_branch
          %530 = sbr.rel (%p528) target = $region72
        $region71: #{tpu_custom_call.1} parent=67 // pred_region
          %531 = dma.done %s524, 128
        $region72: #{tpu_custom_call.1} parent=67 // pred_fallthru
          _
        // Predicated region
        $region73: #{tpu_custom_call.1} parent=67 // pred_check
          %p532 = pneg %p91
        $region74: #{tpu_custom_call.1} parent=67 // pred_check_branch
          %534 = sbr.rel (%p532) target = $region76
        $region75: #{tpu_custom_call.1} parent=67 // pred_region
          %535 = dma.done [#allocation9], 16
        $region76: #{tpu_custom_call.1} parent=67 // pred_fallthru
          _
        // Predicated region
        $region77: #{tpu_custom_call.1} parent=67 // pred_check
          %p536 = pneg %p112
        $region78: #{tpu_custom_call.1} parent=67 // pred_check_branch
          %538 = sbr.rel (%p536) target = $region80
        $region79: #{tpu_custom_call.1} parent=67 // pred_region
          %539 = dma.done [#allocation9], 16
        $region80: #{tpu_custom_call.1} parent=67 // pred_fallthru
          _
        %s540 = sand.u32 %s37, 1
        %s541 = scalar_lea.sflag [#allocation12], %s540
        %s542 = sand.u32 %s125, 1
        %s543 = smul.addr %s542, 16
        %s544 = scalar_lea.vmem [#allocation11], %s543
        // Predicated region
        $region81: #{tpu_custom_call.1} parent=67 // pred_check
          %p545 = pneg %p138
        $region82: #{tpu_custom_call.1} parent=67 // pred_check_branch
          %547 = sbr.rel (%p545) target = $region84
        $region83: #{tpu_custom_call.1} parent=67 // pred_region
          %548 = dma.done %s541, 256
        $region84: #{tpu_custom_call.1} parent=67 // pred_fallthru
          _
        %s549 = sand.u32 %s37, 1
        %s550 = scalar_lea.sflag [#allocation12], %s549
        %s551 = sand.u32 %s151, 1
        %s552 = smul.addr %s551, 4
        %s553 = scalar_lea.vmem [#allocation13], %s552
        // Predicated region
        $region85: #{tpu_custom_call.1} parent=67 // pred_check
          %p554 = pneg %p164
        $region86: #{tpu_custom_call.1} parent=67 // pred_check_branch
          %556 = sbr.rel (%p554) target = $region88
        $region87: #{tpu_custom_call.1} parent=67 // pred_region
          %557 = dma.done %s550, 64
        $region88: #{tpu_custom_call.1} parent=67 // pred_fallthru
          _
        // Predicated region
        $region89: #{tpu_custom_call.1} parent=67 // pred_check
          %p558 = pneg %p185
        $region90: #{tpu_custom_call.1} parent=67 // pred_check_branch
          %560 = sbr.rel (%p558) target = $region92
        $region91: #{tpu_custom_call.1} parent=67 // pred_region
          %561 = dma.done [#allocation15], 16
        $region92: #{tpu_custom_call.1} parent=67 // pred_fallthru
          _
        // Predicated region
        $region93: #{tpu_custom_call.1} parent=67 // pred_check
          %p562 = pneg %p206
        $region94: #{tpu_custom_call.1} parent=67 // pred_check_branch
          %564 = sbr.rel (%p562) target = $region96
        $region95: #{tpu_custom_call.1} parent=67 // pred_region
          %565 = dma.done [#allocation15], 16
        $region96: #{tpu_custom_call.1} parent=67 // pred_fallthru
          _
        // Predicated region
        $region97: #{tpu_custom_call.1} parent=67 // pred_check
          %p566 = pneg %p227
        $region98: #{tpu_custom_call.1} parent=67 // pred_check_branch
          %568 = sbr.rel (%p566) target = $region100
        $region99: #{tpu_custom_call.1} parent=67 // pred_region
          %569 = dma.done [#allocation18], 16
        $region100: #{tpu_custom_call.1} parent=67 // pred_fallthru
          _
        // Predicated region
        $region101: #{tpu_custom_call.1} parent=67 // pred_check
          %p570 = pneg %p248
        $region102: #{tpu_custom_call.1} parent=67 // pred_check_branch
          %572 = sbr.rel (%p570) target = $region104
        $region103: #{tpu_custom_call.1} parent=67 // pred_region
          %573 = dma.done [#allocation18], 256
        $region104: #{tpu_custom_call.1} parent=67 // pred_fallthru
          _
        // Predicated region
        $region105: #{tpu_custom_call.1} parent=67 // pred_check
          %p574 = pneg %p269
        $region106: #{tpu_custom_call.1} parent=67 // pred_check_branch
          %576 = sbr.rel (%p574) target = $region108
        $region107: #{tpu_custom_call.1} parent=67 // pred_region
          %577 = dma.done [#allocation21], 16
        $region108: #{tpu_custom_call.1} parent=67 // pred_fallthru
          _
        // Predicated region
        $region109: #{tpu_custom_call.1} parent=67 // pred_check
          %p578 = pneg %p290
        $region110: #{tpu_custom_call.1} parent=67 // pred_check_branch
          %580 = sbr.rel (%p578) target = $region112
        $region111: #{tpu_custom_call.1} parent=67 // pred_region
          %581 = dma.done [#allocation21], 1024
        $region112: #{tpu_custom_call.1} parent=67 // pred_fallthru
          _
        // Predicated region
        $region113: #{tpu_custom_call.1} parent=67 // pred_check
          %p582 = pneg %p311
        $region114: #{tpu_custom_call.1} parent=67 // pred_check_branch
          %584 = sbr.rel (%p582) target = $region116
        $region115: #{tpu_custom_call.1} parent=67 // pred_region
          %585 = dma.done [#allocation24], 16
        $region116: #{tpu_custom_call.1} parent=67 // pred_fallthru
          _
        %s586 = sand.u32 %s57, 1
        %s587 = scalar_lea.sflag [#allocation6], %s586
        %s588 = sand.u32 %s57, 1
        %s589 = smul.addr %s588, 8
        %s590 = scalar_lea.vmem [#allocation5], %s589
        %p591 = pneg %p70
        %p592 = pneg %p67
        %p593 = pneg %p91
        %p594 = pneg %p88
        %p595 = pneg %p112
        %p596 = pneg %p109
        %s597 = sand.u32 %s37, 1
        %s598 = scalar_lea.sflag [#allocation12], %s597
        %s599 = sand.u32 %s125, 1
        %s600 = smul.addr %s599, 16
        %s601 = scalar_lea.vmem [#allocation11], %s600
        %p602 = pneg %p138
        %p603 = pneg %p135
        %s604 = sand.u32 %s37, 1
        %s605 = scalar_lea.sflag [#allocation12], %s604
        %s606 = sand.u32 %s151, 1
        %s607 = smul.addr %s606, 4
        %s608 = scalar_lea.vmem [#allocation13], %s607
        %p609 = pneg %p164
        %p610 = pneg %p161
        %p611 = pneg %p185
        %p612 = pneg %p182
        %p613 = pneg %p206
        %p614 = pneg %p203
        %p615 = pneg %p227
        %p616 = pneg %p224
        %p617 = pneg %p248
        %p618 = pneg %p245
        %p619 = pneg %p269
        %p620 = pneg %p266
        %p621 = pneg %p290
        %p622 = pneg %p287
        %p623 = pneg %p311
        %p624 = pneg %p308
        %p625 = pneg %p337
        %p626 = pneg %p334
        %s627 = sand.u32 %s324, 1
        %s628 = scalar_lea.sflag [#allocation7], %s627
        %s629 = sand.u32 %s324, 1
        %s630 = smul.addr %s629, 8
        %s631 = scalar_lea.vmem [#allocation25], %s630
        %p633 = scmp.eq.s32.totalorder %s42, 0
        // Predicated region
        $region117: #{tpu_custom_call.1} parent=67 // pred_check
          %p634 = pneg %p633
        $region118: #{tpu_custom_call.1} parent=67 // pred_check_branch
          %636 = sbr.rel (%p634) target = $region120
        $region119: #{tpu_custom_call.1} parent=67 // pred_region
          %v637 = vld [vmem:[%s527] sm:$0xff]
          %v638 = vld [vmem:[#allocation8] sm:$0x1]
          %v639 = vld [vmem:[#allocation10] sm:$0x1]
          %vm640 = vcmask 261120
          %v641 = vsel %vm640, %v637, 0.0
          %642 = vadd.xlane.f32.xlu0 %v641
          %v643 = vpop.xlane.xlu0 %642
          %v644 = vrcp.pop 32.0
          %v645 = vmul.f32 %v643, %v644
          %v646 = vsub.f32 %v637, %v645
          %v647 = vmul.f32 %v646, %v646
          %v648 = vsel %vm640, %v647, 0.0
          %649 = vadd.xlane.f32.xlu0 %v648
          %v650 = vpop.xlane.xlu0 %649
          %v651 = vmul.f32 %v650, %v644
          %v652 = vadd.f32 %v651, 1e-05
          %v653 = vrsqrt.pop %v652
          %v654 = vmul.f32 %v646, %v653
          %v656 = vlaneseq
          %v657 = vshrl.u32 %v656, 7
          %v658 = vsub.s32 0, %v657
          %v659 = vrot.slane %v638, %v658
          %v661 = vmul.f32 %v654, %v659
          %v663 = vlaneseq
          %v664 = vshrl.u32 %v663, 7
          %v665 = vsub.s32 0, %v664
          %v666 = vrot.slane %v639, %v665
          %v668 = vadd.f32 %v661, %v666
          %v669 = vpack.c.bf16 %v668, %v668
          %vm670 = vcmask 257024
          %671 = vst.msk [vmem:[#allocation2] sm:$0xf] %vm670, %v669
          %672 = vst.msk [vmem:[#allocation3] sm:$0xff] %vm640, 0.0
          %v673 = vlaneseq
          %v674 = vshrl.u32 %v673, 7
          %v675 = vlaneseq
          %v676 = vand.u32 %v675, 127
          %vm677 = vcmp.ge.s32.totalorder %v674, %v676
          %v678 = vsel %vm677, 0.0, -1e+30
          %vm679 = vcmask 64512
          %680 = vst.msk [vmem:[#allocation4] sm:$0xff] %vm679, %v678
        $region120: #{tpu_custom_call.1} parent=67 // pred_fallthru
          _
        %v681 = vld [vmem:[#allocation2] sm:$0xf]
        %v682 = vld [vmem:[%s544] sm:$0xf]
        %v683 = vld [vmem:[%s544 + $0x4] sm:$0xf]
        %v684 = vld [vmem:[%s544 + $0x8] sm:$0xf]
        %v685 = vld [vmem:[%s544 + $0xc] sm:$0xf]
        %v690 = vunpack.c.l.b16 %v682
        %v691 = vunpack.c.l.b16 %v683
        %v692 = vunpack.c.l.b16 %v684
        %v693 = vunpack.c.l.b16 %v685
        %v694 = vpack.c.b16 %v691, %v690
        %v695 = vpack.c.b16 %v693, %v692
        %vm698 = vcmask 261120
        %v700 = vsel %vm698, %v681, 0
        %702 = vmatprep.subr.bf16.mxu0 0
        %703 = vmatpush1.bf16.msra.mxu0 %v694
        %704 = vmatprep.subr.bf16.mxu0 0
        %705 = vmatpush1.bf16.msra.mxu0 %v695
        %706 = vmatprep.subr.bf16.mxu0 0
        %707 = vmatpush1.bf16.msra.mxu0 0
        %708 = vmatprep.subr.bf16.mxu0 0
        %709 = vmatpush1.bf16.msra.mxu0 0
        %710 = vmatprep.subr.bf16.mxu0 0
        %711 = vmatpush1.bf16.msra.mxu0 0
        %712 = vmatprep.subr.bf16.mxu0 0
        %713 = vmatpush1.bf16.msra.mxu0 0
        %714 = vmatprep.subr.bf16.mxu0 0
        %715 = vmatpush1.bf16.msra.mxu0 0
        %716 = vmatprep.subr.bf16.mxu0 0
        %717 = vmatpush1.bf16.msra.mxu0 0
        %718 = vmatprep.subr.bf16.mxu0 0
        %719 = vmatpush1.bf16.msra.mxu0 0
        %720 = vmatprep.subr.bf16.mxu0 0
        %721 = vmatpush1.bf16.msra.mxu0 0
        %722 = vmatprep.subr.bf16.mxu0 0
        %723 = vmatpush1.bf16.msra.mxu0 0
        %724 = vmatprep.subr.bf16.mxu0 0
        %725 = vmatpush1.bf16.msra.mxu0 0
        %726 = vmatprep.subr.bf16.mxu0 0
        %727 = vmatpush1.bf16.msra.mxu0 0
        %728 = vmatprep.subr.bf16.mxu0 0
        %729 = vmatpush1.bf16.msra.mxu0 0
        %730 = vmatprep.subr.bf16.mxu0 0
        %731 = vmatpush1.bf16.msra.mxu0 0
        %732 = vmatprep.subr.bf16.mxu0 0
        %733 = vmatpush1.bf16.msra.mxu0 0
        %734 = vmatprep.mubr.bf16.mxu0 0
        %735 = vmatmul.mubr.bf16.gmra.mrb[0].mxu0 %v700
        %v736 = vpop.f32.mrb[0].mxu0
        %v737 = vadd.f32 0.0, %v736
        %v738 = vpop.f32.mrb[0].mxu0
        %v739 = vpop.f32.mrb[0].mxu0
        %v740 = vpop.f32.mrb[0].mxu0
        %741 = vdwg.mxu0
        %v742 = vpack.c.bf16 %v737, %v737
        %744 = vrot.lane.b32.xlu0 %v742, 120
        %v745 = vpop.permute.xlu0 %744
        %vm746 = vcmask 64512
        %v748 = vsel %vm746, %v742, 0
        %v751 = vsel %vm746, %v745, 0
        %753 = vmatprep.subr.bf16.mxu0 0
        %754 = vmatpush1.bf16.xpose.msra.mxu0 %v751
        %755 = vmatprep.subr.bf16.mxu0 0
        %756 = vmatpush1.bf16.xpose.msra.mxu0 0
        %757 = vmatprep.subr.bf16.mxu0 0
        %758 = vmatpush1.bf16.xpose.msra.mxu0 0
        %759 = vmatprep.subr.bf16.mxu0 0
        %760 = vmatpush1.bf16.xpose.msra.mxu0 0
        %761 = vmatprep.subr.bf16.mxu0 0
        %762 = vmatpush1.bf16.xpose.msra.mxu0 0
        %763 = vmatprep.subr.bf16.mxu0 0
        %764 = vmatpush1.bf16.xpose.msra.mxu0 0
        %765 = vmatprep.subr.bf16.mxu0 0
        %766 = vmatpush1.bf16.xpose.msra.mxu0 0
        %767 = vmatprep.subr.bf16.mxu0 0
        %768 = vmatpush1.bf16.xpose.msra.mxu0 0
        %769 = vmatprep.subr.bf16.mxu0 0
        %770 = vmatpush1.bf16.xpose.msra.mxu0 0
        %771 = vmatprep.subr.bf16.mxu0 0
        %772 = vmatpush1.bf16.xpose.msra.mxu0 0
        %773 = vmatprep.subr.bf16.mxu0 0
        %774 = vmatpush1.bf16.xpose.msra.mxu0 0
        %775 = vmatprep.subr.bf16.mxu0 0
        %776 = vmatpush1.bf16.xpose.msra.mxu0 0
        %777 = vmatprep.subr.bf16.mxu0 0
        %778 = vmatpush1.bf16.xpose.msra.mxu0 0
        %779 = vmatprep.subr.bf16.mxu0 0
        %780 = vmatpush1.bf16.xpose.msra.mxu0 0
        %781 = vmatprep.subr.bf16.mxu0 0
        %782 = vmatpush1.bf16.xpose.msra.mxu0 0
        %783 = vmatprep.subr.bf16.mxu0 0
        %784 = vmatpush1.bf16.xpose.msra.mxu0 0
        %785 = vmatprep.mubr.bf16.mxu0 0
        %786 = vmatmul.mubr.bf16.gmra.mrb[0].mxu0 %v748
        %v787 = vpop.f32.mrb[0].mxu0
        %v788 = vadd.f32 0.0, %v787
        %v789 = vpop.f32.mrb[0].mxu0
        %v790 = vpop.f32.mrb[0].mxu0
        %v791 = vpop.f32.mrb[0].mxu0
        %792 = vdwg.mxu0
        %v793 = vmul.f32 %v788, 0.17677669
        %v794 = vld [vmem:[#allocation4] sm:$0xff]
        %v795 = vadd.f32 %v793, %v794
        %v796 = vsel %vm746, %v795, -inf
        %797 = vmax.xlane.f32.xlu0 %v796
        %v798 = vpop.xlane.xlu0 %797
        %v799 = vsub.f32 %v795, %v798
        %v800 = vmul.f32 %v799, 1.442695
        %v801 = vpow.pop %v800
        %v802 = vsel %vm746, %v801, 0.0
        %803 = vadd.xlane.f32.xlu0 %v802
        %v804 = vpop.xlane.xlu0 %803
        %v805 = vrcp.pop %v804
        %v806 = vmul.f32 %v801, %v805
        %v807 = vpack.c.bf16 %v806, %v806
        %808 = vrot.lane.b32.xlu0 %v742, 112
        %v809 = vpop.permute.xlu0 %808
        %v811 = vsel %vm746, %v807, 0
        %vm813 = vcmask 1043456
        %v815 = vsel %vm813, %v809, 0
        %817 = vmatprep.subr.bf16.mxu0 0
        %818 = vmatpush1.bf16.msra.mxu0 %v815
        %819 = vmatprep.subr.bf16.mxu0 0
        %820 = vmatpush1.bf16.msra.mxu0 0
        %821 = vmatprep.subr.bf16.mxu0 0
        %822 = vmatpush1.bf16.msra.mxu0 0
        %823 = vmatprep.subr.bf16.mxu0 0
        %824 = vmatpush1.bf16.msra.mxu0 0
        %825 = vmatprep.subr.bf16.mxu0 0
        %826 = vmatpush1.bf16.msra.mxu0 0
        %827 = vmatprep.subr.bf16.mxu0 0
        %828 = vmatpush1.bf16.msra.mxu0 0
        %829 = vmatprep.subr.bf16.mxu0 0
        %830 = vmatpush1.bf16.msra.mxu0 0
        %831 = vmatprep.subr.bf16.mxu0 0
        %832 = vmatpush1.bf16.msra.mxu0 0
        %833 = vmatprep.subr.bf16.mxu0 0
        %834 = vmatpush1.bf16.msra.mxu0 0
        %835 = vmatprep.subr.bf16.mxu0 0
        %836 = vmatpush1.bf16.msra.mxu0 0
        %837 = vmatprep.subr.bf16.mxu0 0
        %838 = vmatpush1.bf16.msra.mxu0 0
        %839 = vmatprep.subr.bf16.mxu0 0
        %840 = vmatpush1.bf16.msra.mxu0 0
        %841 = vmatprep.subr.bf16.mxu0 0
        %842 = vmatpush1.bf16.msra.mxu0 0
        %843 = vmatprep.subr.bf16.mxu0 0
        %844 = vmatpush1.bf16.msra.mxu0 0
        %845 = vmatprep.subr.bf16.mxu0 0
        %846 = vmatpush1.bf16.msra.mxu0 0
        %847 = vmatprep.subr.bf16.mxu0 0
        %848 = vmatpush1.bf16.msra.mxu0 0
        %849 = vmatprep.mubr.bf16.mxu0 0
        %850 = vmatmul.mubr.bf16.gmra.mrb[0].mxu0 %v811
        %v851 = vpop.f32.mrb[0].mxu0
        %v852 = vadd.f32 0.0, %v851
        %v853 = vpop.f32.mrb[0].mxu0
        %v854 = vpop.f32.mrb[0].mxu0
        %v855 = vpop.f32.mrb[0].mxu0
        %856 = vdwg.mxu0
        %v857 = vld [vmem:[#allocation3] sm:$0xff]
        %v858 = vpack.c.bf16 %v852, %v852
        %v859 = vld [vmem:[%s553] sm:$0xf]
        %v861 = vsel %vm746, %v858, 0
        %v864 = vsel %vm813, %v859, 0
        %866 = vmatprep.subr.bf16.mxu0 0
        %867 = vmatpush1.bf16.msra.mxu0 %v864
        %868 = vmatprep.subr.bf16.mxu0 0
        %869 = vmatpush1.bf16.msra.mxu0 0
        %870 = vmatprep.subr.bf16.mxu0 0
        %871 = vmatpush1.bf16.msra.mxu0 0
        %872 = vmatprep.subr.bf16.mxu0 0
        %873 = vmatpush1.bf16.msra.mxu0 0
        %874 = vmatprep.subr.bf16.mxu0 0
        %875 = vmatpush1.bf16.msra.mxu0 0
        %876 = vmatprep.subr.bf16.mxu0 0
        %877 = vmatpush1.bf16.msra.mxu0 0
        %878 = vmatprep.subr.bf16.mxu0 0
        %879 = vmatpush1.bf16.msra.mxu0 0
        %880 = vmatprep.subr.bf16.mxu0 0
        %881 = vmatpush1.bf16.msra.mxu0 0
        %882 = vmatprep.subr.bf16.mxu0 0
        %883 = vmatpush1.bf16.msra.mxu0 0
        %884 = vmatprep.subr.bf16.mxu0 0
        %885 = vmatpush1.bf16.msra.mxu0 0
        %886 = vmatprep.subr.bf16.mxu0 0
        %887 = vmatpush1.bf16.msra.mxu0 0
        %888 = vmatprep.subr.bf16.mxu0 0
        %889 = vmatpush1.bf16.msra.mxu0 0
        %890 = vmatprep.subr.bf16.mxu0 0
        %891 = vmatpush1.bf16.msra.mxu0 0
        %892 = vmatprep.subr.bf16.mxu0 0
        %893 = vmatpush1.bf16.msra.mxu0 0
        %894 = vmatprep.subr.bf16.mxu0 0
        %895 = vmatpush1.bf16.msra.mxu0 0
        %896 = vmatprep.subr.bf16.mxu0 0
        %897 = vmatpush1.bf16.msra.mxu0 0
        %898 = vmatprep.mubr.bf16.mxu0 0
        %899 = vmatmul.mubr.bf16.gmra.mrb[0].mxu0 %v861
        %v900 = vpop.f32.mrb[0].mxu0
        %v901 = vadd.f32 0.0, %v900
        %v902 = vpop.f32.mrb[0].mxu0
        %v903 = vpop.f32.mrb[0].mxu0
        %v904 = vpop.f32.mrb[0].mxu0
        %905 = vdwg.mxu0
        %v906 = vadd.f32 %v857, %v901
        %907 = vst.msk [vmem:[#allocation3] sm:$0xff] %vm698, %v906
        %p908 = scmp.eq.s32.totalorder %s42, 3
        // Predicated region
        $region121: #{tpu_custom_call.1} parent=67 // pred_check
          %p909 = pneg %p908
        $region122: #{tpu_custom_call.1} parent=67 // pred_check_branch
          %911 = sbr.rel (%p909) target = $region124
        $region123: #{tpu_custom_call.1} parent=67 // pred_region
          %v912 = vld [vmem:[%s527] sm:$0xff]
          %v913 = vld [vmem:[#allocation3] sm:$0xff]
          %v914 = vadd.f32 %v912, %v913
          %v915 = vld [vmem:[#allocation14] sm:$0x1]
          %v917 = vlaneseq
          %v918 = vshrl.u32 %v917, 7
          %v919 = vsub.s32 0, %v918
          %v920 = vrot.slane %v915, %v919
          %v922 = vadd.f32 %v914, %v920
          %v923 = vld [vmem:[#allocation16] sm:$0x1]
          %v924 = vld [vmem:[#allocation17] sm:$0x1]
          %v925 = vsel %vm698, %v922, 0.0
          %926 = vadd.xlane.f32.xlu0 %v925
          %v927 = vpop.xlane.xlu0 %926
          %v928 = vrcp.pop 32.0
          %v929 = vmul.f32 %v927, %v928
          %v930 = vsub.f32 %v922, %v929
          %v931 = vmul.f32 %v930, %v930
          %v932 = vsel %vm698, %v931, 0.0
          %933 = vadd.xlane.f32.xlu0 %v932
          %v934 = vpop.xlane.xlu0 %933
          %v935 = vmul.f32 %v934, %v928
          %v936 = vadd.f32 %v935, 1e-05
          %v937 = vrsqrt.pop %v936
          %v938 = vmul.f32 %v930, %v937
          %v940 = vlaneseq
          %v941 = vshrl.u32 %v940, 7
          %v942 = vsub.s32 0, %v941
          %v943 = vrot.slane %v923, %v942
          %v945 = vmul.f32 %v938, %v943
          %v947 = vlaneseq
          %v948 = vshrl.u32 %v947, 7
          %v949 = vsub.s32 0, %v948
          %v950 = vrot.slane %v924, %v949
          %v952 = vadd.f32 %v945, %v950
          %v953 = vpack.c.bf16 %v952, %v952
          %v954 = vld [vmem:[#allocation19] sm:$0xf]
          %v955 = vld [vmem:[#allocation19 + $0x4] sm:$0xf]
          %v956 = vld [vmem:[#allocation19 + $0x8] sm:$0xf]
          %v957 = vld [vmem:[#allocation19 + $0xc] sm:$0xf]
          %v958 = vld [vmem:[#allocation20] sm:$0x1]
          %v960 = vlaneseq
          %v961 = vshrl.u32 %v960, 7
          %v962 = vsub.s32 0, %v961
          %v963 = vrot.slane %v958, %v962
          %v969 = vunpack.c.l.b16 %v954
          %v970 = vunpack.c.l.b16 %v955
          %v971 = vunpack.c.l.b16 %v956
          %v972 = vunpack.c.l.b16 %v957
          %v973 = vpack.c.b16 %v970, %v969
          %v974 = vpack.c.b16 %v972, %v971
          %v978 = vsel %vm698, %v953, 0
          %980 = vmatprep.subr.bf16.mxu0 0
          %981 = vmatpush1.bf16.msra.mxu0 %v973
          %982 = vmatprep.subr.bf16.mxu0 0
          %983 = vmatpush1.bf16.msra.mxu0 %v974
          %984 = vmatprep.subr.bf16.mxu0 0
          %985 = vmatpush1.bf16.msra.mxu0 0
          %986 = vmatprep.subr.bf16.mxu0 0
          %987 = vmatpush1.bf16.msra.mxu0 0
          %988 = vmatprep.subr.bf16.mxu0 0
          %989 = vmatpush1.bf16.msra.mxu0 0
          %990 = vmatprep.subr.bf16.mxu0 0
          %991 = vmatpush1.bf16.msra.mxu0 0
          %992 = vmatprep.subr.bf16.mxu0 0
          %993 = vmatpush1.bf16.msra.mxu0 0
          %994 = vmatprep.subr.bf16.mxu0 0
          %995 = vmatpush1.bf16.msra.mxu0 0
          %996 = vmatprep.subr.bf16.mxu0 0
          %997 = vmatpush1.bf16.msra.mxu0 0
          %998 = vmatprep.subr.bf16.mxu0 0
          %999 = vmatpush1.bf16.msra.mxu0 0
          %1000 = vmatprep.subr.bf16.mxu0 0
          %1001 = vmatpush1.bf16.msra.mxu0 0
          %1002 = vmatprep.subr.bf16.mxu0 0
          %1003 = vmatpush1.bf16.msra.mxu0 0
          %1004 = vmatprep.subr.bf16.mxu0 0
          %1005 = vmatpush1.bf16.msra.mxu0 0
          %1006 = vmatprep.subr.bf16.mxu0 0
          %1007 = vmatpush1.bf16.msra.mxu0 0
          %1008 = vmatprep.subr.bf16.mxu0 0
          %1009 = vmatpush1.bf16.msra.mxu0 0
          %1010 = vmatprep.subr.bf16.mxu0 0
          %1011 = vmatpush1.bf16.msra.mxu0 0
          %1012 = vmatprep.mubr.bf16.mxu0 0
          %1013 = vmatmul.mubr.bf16.gmra.mrb[0].mxu0 %v978
          %v1014 = vpop.f32.mrb[0].mxu0
          %v1015 = vadd.f32 %v963, %v1014
          %v1016 = vpop.f32.mrb[0].mxu0
          %v1017 = vpop.f32.mrb[0].mxu0
          %v1018 = vpop.f32.mrb[0].mxu0
          %1019 = vdwg.mxu0
          %v1020 = vmax.f32 %v1015, 0.0
          %v1021 = vpack.c.bf16 %v1020, %v1020
          %v1022 = vld [vmem:[#allocation22] sm:$0xf]
          %v1023 = vld [vmem:[#allocation22 + $0x4] sm:$0xf]
          %v1024 = vld [vmem:[#allocation22 + $0x8] sm:$0xf]
          %v1025 = vld [vmem:[#allocation22 + $0xc] sm:$0xf]
          %v1026 = vld [vmem:[#allocation22 + $0x10] sm:$0xf]
          %v1027 = vld [vmem:[#allocation22 + $0x14] sm:$0xf]
          %v1028 = vld [vmem:[#allocation22 + $0x18] sm:$0xf]
          %v1029 = vld [vmem:[#allocation22 + $0x1c] sm:$0xf]
          %v1030 = vld [vmem:[#allocation22 + $0x20] sm:$0xf]
          %v1031 = vld [vmem:[#allocation22 + $0x24] sm:$0xf]
          %v1032 = vld [vmem:[#allocation22 + $0x28] sm:$0xf]
          %v1033 = vld [vmem:[#allocation22 + $0x2c] sm:$0xf]
          %v1034 = vld [vmem:[#allocation22 + $0x30] sm:$0xf]
          %v1035 = vld [vmem:[#allocation22 + $0x34] sm:$0xf]
          %v1036 = vld [vmem:[#allocation22 + $0x38] sm:$0xf]
          %v1037 = vld [vmem:[#allocation22 + $0x3c] sm:$0xf]
          %v1038 = vld [vmem:[#allocation23] sm:$0x1]
          %v1040 = vlaneseq
          %v1041 = vshrl.u32 %v1040, 7
          %v1042 = vsub.s32 0, %v1041
          %v1043 = vrot.slane %v1038, %v1042
          %v1061 = vunpack.c.l.b16 %v1022
          %v1062 = vunpack.c.l.b16 %v1023
          %v1063 = vunpack.c.l.b16 %v1024
          %v1064 = vunpack.c.l.b16 %v1025
          %v1065 = vunpack.c.l.b16 %v1026
          %v1066 = vunpack.c.l.b16 %v1027
          %v1067 = vunpack.c.l.b16 %v1028
          %v1068 = vunpack.c.l.b16 %v1029
          %v1069 = vunpack.c.l.b16 %v1030
          %v1070 = vunpack.c.l.b16 %v1031
          %v1071 = vunpack.c.l.b16 %v1032
          %v1072 = vunpack.c.l.b16 %v1033
          %v1073 = vunpack.c.l.b16 %v1034
          %v1074 = vunpack.c.l.b16 %v1035
          %v1075 = vunpack.c.l.b16 %v1036
          %v1076 = vunpack.c.l.b16 %v1037
          %v1077 = vpack.c.b16 %v1062, %v1061
          %v1078 = vpack.c.b16 %v1064, %v1063
          %v1079 = vpack.c.b16 %v1066, %v1065
          %v1080 = vpack.c.b16 %v1068, %v1067
          %v1081 = vpack.c.b16 %v1070, %v1069
          %v1082 = vpack.c.b16 %v1072, %v1071
          %v1083 = vpack.c.b16 %v1074, %v1073
          %v1084 = vpack.c.b16 %v1076, %v1075
          %1093 = vmatprep.subr.bf16.mxu0 0
          %1094 = vmatpush1.bf16.msra.mxu0 %v1077
          %1095 = vmatprep.subr.bf16.mxu0 0
          %1096 = vmatpush1.bf16.msra.mxu0 %v1078
          %1097 = vmatprep.subr.bf16.mxu0 0
          %1098 = vmatpush1.bf16.msra.mxu0 %v1079
          %1099 = vmatprep.subr.bf16.mxu0 0
          %1100 = vmatpush1.bf16.msra.mxu0 %v1080
          %1101 = vmatprep.subr.bf16.mxu0 0
          %1102 = vmatpush1.bf16.msra.mxu0 %v1081
          %1103 = vmatprep.subr.bf16.mxu0 0
          %1104 = vmatpush1.bf16.msra.mxu0 %v1082
          %1105 = vmatprep.subr.bf16.mxu0 0
          %1106 = vmatpush1.bf16.msra.mxu0 %v1083
          %1107 = vmatprep.subr.bf16.mxu0 0
          %1108 = vmatpush1.bf16.msra.mxu0 %v1084
          %1109 = vmatprep.subr.bf16.mxu0 0
          %1110 = vmatpush1.bf16.msra.mxu0 0
          %1111 = vmatprep.subr.bf16.mxu0 0
          %1112 = vmatpush1.bf16.msra.mxu0 0
          %1113 = vmatprep.subr.bf16.mxu0 0
          %1114 = vmatpush1.bf16.msra.mxu0 0
          %1115 = vmatprep.subr.bf16.mxu0 0
          %1116 = vmatpush1.bf16.msra.mxu0 0
          %1117 = vmatprep.subr.bf16.mxu0 0
          %1118 = vmatpush1.bf16.msra.mxu0 0
          %1119 = vmatprep.subr.bf16.mxu0 0
          %1120 = vmatpush1.bf16.msra.mxu0 0
          %1121 = vmatprep.subr.bf16.mxu0 0
          %1122 = vmatpush1.bf16.msra.mxu0 0
          %1123 = vmatprep.subr.bf16.mxu0 0
          %1124 = vmatpush1.bf16.msra.mxu0 0
          %1125 = vmatprep.mubr.bf16.mxu0 0
          %1126 = vmatmul.mubr.bf16.gmra.mrb[0].mxu0 %v1021
          %v1127 = vpop.f32.mrb[0].mxu0
          %v1128 = vadd.f32 %v1043, %v1127
          %v1129 = vpop.f32.mrb[0].mxu0
          %v1130 = vpop.f32.mrb[0].mxu0
          %v1131 = vpop.f32.mrb[0].mxu0
          %1132 = vdwg.mxu0
          %v1133 = vadd.f32 %v922, %v1128
          %1134 = vst.msk [vmem:[%s631] sm:$0xff] %vm698, %v1133
        $region124: #{tpu_custom_call.1} parent=67 // pred_fallthru
          _
        %s1135 = sand.u32 %s324, 1
        %s1136 = scalar_lea.sflag [#allocation7], %s1135
        %s1137 = sand.u32 %s324, 1
        %s1138 = smul.addr %s1137, 8
        %s1139 = scalar_lea.vmem [#allocation25], %s1138
        // Predicated region
        $region125: #{tpu_custom_call.1} parent=67 // pred_check
          %p1140 = pneg %p334
        $region126: #{tpu_custom_call.1} parent=67 // pred_check_branch
          %1142 = sbr.rel (%p1140) target = $region128
        $region127: #{tpu_custom_call.1} parent=67 // pred_region
          %s1144 = ssub.s32 128, 128
          %1145 = vsyncadd %s1136, %s1144
          %s1146 = smul.addr %s41, 128
          %s1147 = scalar_lea.hbm %s12, %s1146
          %s1149 = sshll.u32 %s1139, 4
          %s1150 = int_to_ptr.vmem [resolvable:$true] %s1149
          %1152 = dma.vmem_to_hbm [thread:$0]  %s1150, 128, %s1147, %s1136
        $region128: #{tpu_custom_call.1} parent=67 // pred_fallthru
          _
      $region68: #{tpu_custom_call.1} parent=5 // pred_fallthru
        _
      %p1153 = scmp.le.s32.totalorder 2, %s32
      // Predicated region
      $region129: #{tpu_custom_call.1} parent=5 // pred_check
        %p1154 = pneg %p1153
      $region130: #{tpu_custom_call.1} parent=5 // pred_check_branch
        %1156 = sbr.rel (%p1154) target = $region132
      $region131: #{tpu_custom_call.1} parent=5 // pred_region
        %s1157 = ssub.s32 %s32, 2
        // Predicated region
        $region133: #{tpu_custom_call.1} parent=131 // pred_check
          %p1158 = pneg %p340
        $region134: #{tpu_custom_call.1} parent=131 // pred_check_branch
          %1160 = sbr.rel (%p1158) target = $region136
        $region135: #{tpu_custom_call.1} parent=131 // pred_region
          %s1161 = sand.u32 %s325, 1
          %s1162 = scalar_lea.sflag [#allocation7], %s1161
          %s1163 = sand.u32 %s325, 1
          %s1164 = smul.addr %s1163, 8
          %s1165 = scalar_lea.vmem [#allocation25], %s1164
          %1166 = dma.done %s1162, 128
        $region136: #{tpu_custom_call.1} parent=131 // pred_fallthru
          _
      $region132: #{tpu_custom_call.1} parent=5 // pred_fallthru
        _
    $region6: #{tpu_custom_call.1} parent=1 // loop_footer
      %s36 = sadd.s32 1, %s32
    $region7: #{tpu_custom_call.1} parent=1 // loop_footer_branch
      %31 = sbr.rel target = $region3
    $region8: #{tpu_custom_call.1} parent=1 // loop_exit
      _
    %1167 = vsyncpa [#allocation6], 1
    %s1168 = scalar_lea.sflag [#allocation6], 1
    %1169 = vsyncpa %s1168, 1
    %1170 = vsyncpa [#allocation9], 1
    %1171 = vsyncpa [#allocation12], 1
    %s1172 = scalar_lea.sflag [#allocation12], 1
    %1173 = vsyncpa %s1172, 1
    %1174 = vsyncpa [#allocation15], 1
    %1175 = vsyncpa [#allocation18], 1
    %1176 = vsyncpa [#allocation21], 1
    %1177 = vsyncpa [#allocation24], 1
    %1178 = vsyncpa [#allocation7], 1
    %s1179 = scalar_lea.sflag [#allocation7], 1
    %1180 = vsyncpa %s1179, 1

</llo_original>
